<compile_context>
chip_gen: v7x
topology: tpu7x:2x2x1
jax: 0.10.0
libtpu: 0.0.40
codegen_flags: <defaults>
</compile_context>

<pallas_src>
from functools import partial

import jax
import jax.numpy as jnp
from jax.experimental import pallas as pl
from jax.experimental.pallas import tpu as pltpu

_SUB = 8        # sublane granule
_LANE = 128     # lane granule
_T_CHUNK = 8    # timesteps fused per grid step
_BT_MAX = 128   # max batch-tile rows (MXU-native M)


def _round_up(x, m):
    return ((x + m - 1) // m) * m


def _pad2(a, rows, cols):
    return jnp.pad(a, ((0, rows - a.shape[0]), (0, cols - a.shape[1])))


def _ctrnn_chunk_kernel(tau, seq, T, gate_tail,
                        hs_ref,                                    # scalar prefetch (SMEM)
                        h0_ref, x_ref, tgt_ref,                    # per-tile / streamed inputs
                        wc_ref, bi_ref, bsum_ref, wo_ref, bo_ref,  # params (VMEM-resident)
                        y_ref, h_ref, loss_ref,                    # outputs
                        xh_ref):                                   # scratch: [x_t, tanh(h_prev)] f32
    """Fused CTRNN chunk.  Grid = (batch_tiles, seq_chunks); chunks are the recurrence."""
    c = pl.program_id(1)
    inv = 1.0 / tau
    n_in_p = x_ref.shape[-1]

    # Fresh lane-dense (bt, 128) loss block each chunk: zero once, then T
    # static single-column stores (no O(seq^2) slab read-modify-write).
    loss_ref[...] = jnp.zeros_like(loss_ref)

    @pl.when(c == 0)
    def _():
        # Seed tanh(h_prev) for this batch tile: carried state, or zeros for a
        # reset start (then the fused matmul's h-part contributes exactly 0,
        # i.e. h_new = i2h(x0), matching PyTorch's `h is None` path).
        xh_ref[:, n_in_p:] = jnp.where(hs_ref[0] != 0, jnp.tanh(h0_ref[...]), 0.0)

    def step(t):
        # One fused MXU call per step: [x_t, tanh(h_prev)] @ [[Wi];[Wh]]  (bf16 operands,
        # f32 accumulation).
        xh_ref[:, :n_in_p] = x_ref[t]
        pre = jnp.dot(xh_ref[...].astype(jnp.bfloat16), wc_ref[...],
                      preferred_element_type=jnp.float32)

        def cont():
            h_ref[...] = (1.0 - inv) * h_ref[...] + inv * (pre + bsum_ref[...])

        if t == 0:
            @pl.when(c == 0)
            def _():
                @pl.when(hs_ref[0] == 0)
                def _():                                  # PyTorch `h is None`: h = i2h(x)
                    h_ref[...] = pre + bi_ref[...]

                @pl.when(hs_ref[0] != 0)
                def _():
                    h_ref[...] = (1.0 - inv) * h0_ref[...] + inv * (pre + bsum_ref[...])

            pl.when(c > 0)(cont)
        else:
            cont()

        # Output head: Tanh(h2o(Tanh(h_new))); carry tanh(h_new) for the next step.
        th = jnp.tanh(h_ref[...])
        xh_ref[:, n_in_p:] = th
        y = jnp.tanh(jnp.dot(th.astype(jnp.bfloat16), wo_ref[...],
                             preferred_element_type=jnp.float32) + bo_ref[...])
        y_ref[t] = y

        # Per-row squared-error sum for this step -> static lane column t.
        d = y - tgt_ref[t]
        loss_ref[:, pl.ds(t, 1)] = jnp.sum(d * d, axis=1, keepdims=True)

    for t in range(T):                         # static unroll over the time chunk
        if gate_tail:
            pl.when(c * T + t < seq)(lambda t=t: step(t))
        else:
            step(t)


@partial(jax.jit, static_argnames=("tau", "seq", "T", "bt"))
def ctrnn_sequence(params_p, xs_p, ts_p, h0_p, has_state, *, tau, seq, T, bt):
    """Run the full (padded) sequence in one pallas_call.

    xs_p: (seq_padT, Bp, n_in_p)  ts_p: (seq_padT, Bp, n_out_p)  h0_p: (Bp, n_hid_p)
    has_state: int32[1] — 1 if h0 is a valid carried state, 0 for a reset start.
    Returns (ys_p, h_final, loss_slab); loss_slab is (Bp, n_chunks*128) where
    lane t of chunk block c holds the squared-error row sum of step c*T + t.
    """
    seq_padT, Bp, n_in_p = xs_p.shape
    n_out_p = ts_p.shape[-1]
    n_hid_p = h0_p.shape[-1]
    n_chunks = seq_padT // T
    n_btiles = Bp // bt

    # index_maps receive the scalar-prefetch ref as a trailing positional arg.
    xmap = lambda b, c, hs: (c, b, 0)     # streamed per-chunk tensors
    bmap = lambda b, c, hs: (b, 0)        # per-batch-tile resident blocks
    lmap = lambda b, c, hs: (b, c)        # per-chunk loss block
    cmap = lambda b, c, hs: (0, 0)        # params: resident, DMA'd once

    grid_spec = pltpu.PrefetchScalarGridSpec(
        num_scalar_prefetch=1,
        grid=(n_btiles, n_chunks),
        in_specs=[
            pl.BlockSpec((bt, n_hid_p), bmap),                 # h0
            pl.BlockSpec((T, bt, n_in_p), xmap),               # xs chunk
            pl.BlockSpec((T, bt, n_out_p), xmap),              # ts chunk
            pl.BlockSpec((n_in_p + n_hid_p, n_hid_p), cmap),   # [[Wi];[Wh]]  (bf16)
            pl.BlockSpec((1, n_hid_p), cmap),                  # bi
            pl.BlockSpec((1, n_hid_p), cmap),                  # bi + bh
            pl.BlockSpec((n_hid_p, n_out_p), cmap),            # Wo          (bf16)
            pl.BlockSpec((1, n_out_p), cmap),                  # bo
        ],
        out_specs=(
            pl.BlockSpec((T, bt, n_out_p), xmap),              # ys chunk
            pl.BlockSpec((bt, n_hid_p), bmap),                 # h carry / final state
            pl.BlockSpec((bt, _LANE), lmap),                   # loss columns for this chunk
        ),
        scratch_shapes=[pltpu.VMEM((bt, n_in_p + n_hid_p), jnp.float32)],
    )

    # Explicit VMEM budget from the actual block sizes (streamed blocks are
    # double-buffered), clamped to fit every generation (v7x physical = 64 MiB).
    f32, bf16 = 4, 2
    streamed = 2 * bt * (T * n_in_p * f32 + 2 * T * n_out_p * f32
                         + 2 * n_hid_p * f32 + _LANE * f32)
    resident = 2 * ((n_in_p + n_hid_p) * n_hid_p * bf16 + n_hid_p * n_out_p * bf16
                    + (2 * n_hid_p + n_out_p) * f32) + bt * (n_in_p + n_hid_p) * f32
    vmem_limit = int(min(max(2 * (streamed + resident), 32 << 20), 48 << 20))

    gate_tail = (seq_padT != seq)
    return pl.pallas_call(
        partial(_ctrnn_chunk_kernel, float(tau), int(seq), int(T), gate_tail),
        out_shape=(
            jax.ShapeDtypeStruct((seq_padT, Bp, n_out_p), jnp.float32),
            jax.ShapeDtypeStruct((Bp, n_hid_p), jnp.float32),
            jax.ShapeDtypeStruct((Bp, n_chunks * _LANE), jnp.float32),
        ),
        grid_spec=grid_spec,
        compiler_params=pltpu.CompilerParams(
            # chunk axis is the recurrence -> "arbitrary"; batch tiles are
            # independent -> "parallel" (second TensorCore on v7x at large B).
            dimension_semantics=("parallel", "arbitrary"),
            vmem_limit_bytes=vmem_limit),
    )(has_state, h0_p, xs_p, ts_p,
      params_p["wc"], params_p["bi"], params_p["bsum"],
      params_p["wo"], params_p["bo"])


def _init_linear(key, n_in, n_out):
    """Deterministic PyTorch-Linear-like init; weight stored [n_in, n_out]."""
    kw, kb = jax.random.split(key)
    bound = 1.0 / jnp.sqrt(jnp.float32(n_in))
    w = jax.random.uniform(kw, (n_in, n_out), jnp.float32, -bound, bound)
    b = jax.random.uniform(kb, (1, n_out), jnp.float32, -bound, bound)
    return w, b


class CTRNNPallas:
    """Mirrors CTRNN(nn.Module): stateful CTRNNCell + Tanh(h2o(.)) + MSE loss."""

    def __init__(self, n_in, n_hid, n_out, tau, key, t_chunk=_T_CHUNK):
        self.n_in, self.n_hid, self.n_out = n_in, n_hid, n_out
        self.tau = float(tau)
        self.t_chunk = int(t_chunk)
        self.n_in_p = _round_up(n_in, _LANE)
        self.n_hid_p = _round_up(n_hid, _LANE)
        self.n_out_p = _round_up(n_out, _LANE)

        k1, k2, k3 = jax.random.split(key, 3)
        wi, bi = _init_linear(k1, n_in, n_hid)   # i2h
        wh, bh = _init_linear(k2, n_hid, n_hid)  # h2h
        wo, bo = _init_linear(k3, n_hid, n_out)  # h2o
        self.params = dict(wi=wi, bi=bi, wh=wh, bh=bh, wo=wo, bo=bo)

        # Prestack [[Wi];[Wh]] once on the host; bf16 weights for native MXU
        # rate / half the resident VMEM.  Zero pads keep padded hidden lanes
        # exactly zero through the recurrence and the output head.
        wc = jnp.zeros((self.n_in_p + self.n_hid_p, self.n_hid_p), jnp.float32)
        wc = wc.at[:n_in, :n_hid].set(wi)
        wc = wc.at[self.n_in_p:self.n_in_p + n_hid, :n_hid].set(wh)
        self.params_p = dict(
            wc=wc.astype(jnp.bfloat16),
            bi=_pad2(bi, 1, self.n_hid_p),
            bsum=_pad2(bi + bh, 1, self.n_hid_p),
            wo=_pad2(wo, self.n_hid_p, self.n_out_p).astype(jnp.bfloat16),
            bo=_pad2(bo, 1, self.n_out_p),
        )
        self.h = None  # logical (B, n_hid) pre-activation state (matches PyTorch)

    def reset_state(self):
        self.h = None

    def forward_sequence(self, xs, ts):
        """Fused run over a whole sequence.  xs: (seq,B,n_in), ts: (seq,B,n_out).

        Returns (ys: (seq,B,n_out), losses: (seq,)) and updates the carried
        hidden state, so consecutive calls behave like the per-step module.
        """
        seq, B, _ = xs.shape
        if B <= _BT_MAX:
            bt = Bp = _round_up(B, _SUB)      # single tile covering the whole batch
        else:
            bt = _BT_MAX                      # 128-row tiles -> "parallel" axis
            Bp = _round_up(B, _BT_MAX)
        T = min(seq, self.t_chunk)
        seq_padT = _round_up(seq, T)
        n_chunks = seq_padT // T

        xs_p = jnp.zeros((seq_padT, Bp, self.n_in_p), jnp.float32)
        xs_p = xs_p.at[:seq, :B, :self.n_in].set(xs)
        ts_p = jnp.zeros((seq_padT, Bp, self.n_out_p), jnp.float32)
        ts_p = ts_p.at[:seq, :B, :self.n_out].set(ts)

        h0_p = jnp.zeros((Bp, self.n_hid_p), jnp.float32)
        if self.h is None:
            has_state = jnp.array([0], jnp.int32)
        else:
            h0_p = h0_p.at[:B, :self.n_hid].set(self.h)
            has_state = jnp.array([1], jnp.int32)

        ys_p, h_p, loss_slab = ctrnn_sequence(
            self.params_p, xs_p, ts_p, h0_p, has_state,
            tau=self.tau, seq=seq, T=T, bt=bt)

        self.h = h_p[:B, :self.n_hid]
        ys = ys_p[:seq, :B, :self.n_out]
        # Lane t of chunk block c holds step c*T+t; keep true batch rows / true
        # steps only, then normalize by the true element count (MSE).
        per_step = loss_slab.reshape(Bp, n_chunks, _LANE)[:B, :, :T]
        losses = per_step.reshape(B, n_chunks * T)[:, :seq].sum(axis=0) / float(B * self.n_out)
        return ys, losses

    def __call__(self, x, t):
        """Single-step API matching CTRNN.__call__(x, t) -> (y, loss)."""
        ys, losses = self.forward_sequence(x[None], t[None])
        return ys[0], losses[0]


if __name__ == "__main__":
    key = jax.random.PRNGKey(0)
    B, n_in, n_hid, n_out, tau, seq = 2, 16, 32, 8, 2.0, 8

    model = CTRNNPallas(n_in, n_hid, n_out, tau, key)

    kx, kt = jax.random.split(jax.random.PRNGKey(1))
    xs = jax.random.normal(kx, (seq, B, n_in), jnp.float32)
    ts = jax.random.normal(kt, (seq, B, n_out), jnp.float32)

    # First chunk starts from reset state, second continues from the carried
    # hidden state (exercises both first-step paths of the kernel).
    model.reset_state()
    y1, l1 = model.forward_sequence(xs[:5], ts[:5])
    y2, l2 = model.forward_sequence(xs[5:], ts[5:])
    ys = jax.block_until_ready(jnp.concatenate([y1, y2], axis=0))
    losses = jax.block_until_ready(jnp.concatenate([l1, l2], axis=0))

    # Pure-JAX per-step f32 reference (mirrors the PyTorch module exactly).
    p = model.params
    h_ref = None
    ok = True
    atol = rtol = 4e-2  # bf16 MXU operands vs f32 reference (error accumulates over seq)
    for s in range(seq):
        i2h = xs[s] @ p["wi"] + p["bi"]
        if h_ref is None:
            h_new = i2h
        else:
            h2h = jnp.tanh(h_ref) @ p["wh"] + p["bh"]
            h_new = (1.0 - 1.0 / tau) * h_ref + (1.0 / tau) * (i2h + h2h)
        h_ref = h_new
        y_ref = jnp.tanh(jnp.tanh(h_new) @ p["wo"] + p["bo"])
        loss_ref = jnp.mean((y_ref - ts[s]) ** 2)
        ok &= bool(jnp.allclose(ys[s], y_ref, atol=atol, rtol=rtol))
        ok &= bool(jnp.allclose(losses[s], loss_ref, atol=atol, rtol=rtol))
    ok &= bool(jnp.allclose(model.h, h_ref, atol=atol, rtol=rtol))

    print("KERNEL_OK" if ok else "MISMATCH")
</pallas_src>

<mosaic_0001>
module attributes {stable_mosaic.version = 11 : i64} {
  func.func @_ctrnn_chunk_kernel(%arg0: i32, %arg1: i32, %arg2: memref<1xi32, #tpu.memory_space<smem>>, %arg3: memref<8x128xf32, #tpu.memory_space<vmem>>, %arg4: memref<5x8x128xf32, #tpu.memory_space<vmem>>, %arg5: memref<5x8x128xf32, #tpu.memory_space<vmem>>, %arg6: memref<256x128xbf16, #tpu.memory_space<vmem>>, %arg7: memref<1x128xf32, #tpu.memory_space<vmem>>, %arg8: memref<1x128xf32, #tpu.memory_space<vmem>>, %arg9: memref<128x128xbf16, #tpu.memory_space<vmem>>, %arg10: memref<1x128xf32, #tpu.memory_space<vmem>>, %arg11: memref<5x8x128xf32, #tpu.memory_space<vmem>>, %arg12: memref<8x128xf32, #tpu.memory_space<vmem>>, %arg13: memref<8x128xf32, #tpu.memory_space<vmem>>, %arg14: memref<8x256xf32, #tpu.memory_space<vmem>>) attributes {dimension_semantics = [#tpu.dimension_semantics<parallel>, #tpu.dimension_semantics<arbitrary>], iteration_bounds = array<i64: 1, 1>, scalar_prefetch = 1 : i64, scratch_operands = 1 : i64, tpu.core_type = #tpu.core_type<tc>, window_params = [{transform_indices = @transform_0, window_bounds = array<i64: 8, 128>}, {transform_indices = @transform_1, window_bounds = array<i64: 5, 8, 128>}, {transform_indices = @transform_2, window_bounds = array<i64: 5, 8, 128>}, {pipeline_mode = #tpu.pipeline_mode<synchronous>, transform_indices = @transform_3, window_bounds = array<i64: 256, 128>}, {pipeline_mode = #tpu.pipeline_mode<synchronous>, transform_indices = @transform_4, window_bounds = array<i64: 1, 128>}, {pipeline_mode = #tpu.pipeline_mode<synchronous>, transform_indices = @transform_5, window_bounds = array<i64: 1, 128>}, {pipeline_mode = #tpu.pipeline_mode<synchronous>, transform_indices = @transform_6, window_bounds = array<i64: 128, 128>}, {pipeline_mode = #tpu.pipeline_mode<synchronous>, transform_indices = @transform_7, window_bounds = array<i64: 1, 128>}, {transform_indices = @transform_8, window_bounds = array<i64: 5, 8, 128>}, {transform_indices = @transform_9, window_bounds = array<i64: 8, 128>}, {transform_indices = @transform_10, window_bounds = array<i64: 8, 128>}]} {
    %cst = arith.constant 0.000000e+00 : f32
    %0 = vector.broadcast %cst : f32 to vector<8x128xf32>
    %c0 = arith.constant 0 : index
    %c0_0 = arith.constant 0 : index
    %1 = vector.load %arg13[%c0, %c0_0] : memref<8x128xf32, #tpu.memory_space<vmem>>, vector<8x128xf32>
    tpu.vector_store %arg13[%c0, %c0_0], %0 {strides = array<i32>} : memref<8x128xf32, #tpu.memory_space<vmem>>, vector<8x128xf32>,
    %c0_i32 = arith.constant 0 : i32
    %2 = arith.cmpi eq, %arg1, %c0_i32 : i32
    %3 = arith.extui %2 : i1 to i32
    %c0_i32_1 = arith.constant 0 : i32
    %4 = arith.cmpi ne, %3, %c0_i32_1 : i32
    scf.if %4 {
      %c0_173 = arith.constant 0 : index
      %186 = memref.load %arg2[%c0_173] : memref<1xi32, #tpu.memory_space<smem>>
      %c0_i32_174 = arith.constant 0 : i32
      %187 = arith.cmpi ne, %186, %c0_i32_174 : i32
      %c0_175 = arith.constant 0 : index
      %c0_176 = arith.constant 0 : index
      %188 = vector.load %arg3[%c0_175, %c0_176] : memref<8x128xf32, #tpu.memory_space<vmem>>, vector<8x128xf32>
      %189 = math.tanh %188 : vector<8x128xf32>
      %cst_177 = arith.constant 0.000000e+00 : f32
      %190 = vector.broadcast %cst_177 : f32 to vector<8x128xf32>
      %191 = arith.select %187, %189, %190 : vector<8x128xf32>
      %c0_178 = arith.constant 0 : index
      %c128_179 = arith.constant 128 : index
      %192 = vector.load %arg14[%c0_178, %c128_179] : memref<8x256xf32, #tpu.memory_space<vmem>>, vector<8x128xf32>
      tpu.vector_store %arg14[%c0_178, %c128_179], %191 {strides = array<i32>} : memref<8x256xf32, #tpu.memory_space<vmem>>, vector<8x128xf32>,
    } else {
    }
    %c0_2 = arith.constant 0 : index
    %c0_3 = arith.constant 0 : index
    %c0_4 = arith.constant 0 : index
    %5 = vector.load %arg4[%c0_2, %c0_3, %c0_4] : memref<5x8x128xf32, #tpu.memory_space<vmem>>, vector<1x8x128xf32>
    %6 = vector.shape_cast %5 : vector<1x8x128xf32> to vector<8x128xf32>
    %c0_5 = arith.constant 0 : index
    %c0_6 = arith.constant 0 : index
    %7 = vector.load %arg14[%c0_5, %c0_6] : memref<8x256xf32, #tpu.memory_space<vmem>>, vector<8x128xf32>
    tpu.vector_store %arg14[%c0_5, %c0_6], %6 {strides = array<i32>} : memref<8x256xf32, #tpu.memory_space<vmem>>, vector<8x128xf32>,
    %c0_7 = arith.constant 0 : index
    %c0_8 = arith.constant 0 : index
    %8 = vector.load %arg14[%c0_7, %c0_8] : memref<8x256xf32, #tpu.memory_space<vmem>>, vector<8x256xf32>
    %9 = arith.truncf %8 : vector<8x256xf32> to vector<8x256xbf16>
    %c0_9 = arith.constant 0 : index
    %c0_10 = arith.constant 0 : index
    %10 = vector.load %arg6[%c0_9, %c0_10] : memref<256x128xbf16, #tpu.memory_space<vmem>>, vector<256x128xbf16>
    %cst_11 = arith.constant dense<0.000000e+00> : vector<8x128xf32>
    %11 = tpu.matmul %9, %10, %cst_11 {dimension_numbers = #tpu.dot_dimension_numbers<[1], [0], [0], [1], [0, 0, 1, 1], [], []>} : vector<8x256xbf16>, vector<256x128xbf16>, vector<8x128xf32> -> vector<8x128xf32>
    %c0_i32_12 = arith.constant 0 : i32
    %12 = arith.cmpi eq, %arg1, %c0_i32_12 : i32
    %13 = arith.extui %12 : i1 to i32
    %c0_i32_13 = arith.constant 0 : i32
    %14 = arith.cmpi ne, %13, %c0_i32_13 : i32
    scf.if %14 {
      %c0_173 = arith.constant 0 : index
      %186 = memref.load %arg2[%c0_173] : memref<1xi32, #tpu.memory_space<smem>>
      %c0_i32_174 = arith.constant 0 : i32
      %187 = arith.cmpi eq, %186, %c0_i32_174 : i32
      %188 = arith.extui %187 : i1 to i32
      %c0_i32_175 = arith.constant 0 : i32
      %189 = arith.cmpi ne, %188, %c0_i32_175 : i32
      scf.if %189 {
        %c0_179 = arith.constant 0 : index
        %c0_180 = arith.constant 0 : index
        %194 = vector.load %arg7[%c0_179, %c0_180] : memref<1x128xf32, #tpu.memory_space<vmem>>, vector<1x128xf32>
        %195 = vector.broadcast %194 : vector<1x128xf32> to vector<8x128xf32>
        %196 = arith.addf %11, %195 : vector<8x128xf32>
        %c0_181 = arith.constant 0 : index
        %c0_182 = arith.constant 0 : index
        %197 = vector.load %arg12[%c0_181, %c0_182] : memref<8x128xf32, #tpu.memory_space<vmem>>, vector<8x128xf32>
        tpu.vector_store %arg12[%c0_181, %c0_182], %196 {strides = array<i32>} : memref<8x128xf32, #tpu.memory_space<vmem>>, vector<8x128xf32>,
      } else {
      }
      %c0_176 = arith.constant 0 : index
      %190 = memref.load %arg2[%c0_176] : memref<1xi32, #tpu.memory_space<smem>>
      %c0_i32_177 = arith.constant 0 : i32
      %191 = arith.cmpi ne, %190, %c0_i32_177 : i32
      %192 = arith.extui %191 : i1 to i32
      %c0_i32_178 = arith.constant 0 : i32
      %193 = arith.cmpi ne, %192, %c0_i32_178 : i32
      scf.if %193 {
        %c0_179 = arith.constant 0 : index
        %c0_180 = arith.constant 0 : index
        %194 = vector.load %arg3[%c0_179, %c0_180] : memref<8x128xf32, #tpu.memory_space<vmem>>, vector<8x128xf32>
        %cst_181 = arith.constant 5.000000e-01 : f32
        %195 = vector.broadcast %cst_181 : f32 to vector<8x128xf32>
        %196 = arith.mulf %195, %194 : vector<8x128xf32>
        %c0_182 = arith.constant 0 : index
        %c0_183 = arith.constant 0 : index
        %197 = vector.load %arg8[%c0_182, %c0_183] : memref<1x128xf32, #tpu.memory_space<vmem>>, vector<1x128xf32>
        %198 = vector.broadcast %197 : vector<1x128xf32> to vector<8x128xf32>
        %199 = arith.addf %11, %198 : vector<8x128xf32>
        %cst_184 = arith.constant 5.000000e-01 : f32
        %200 = vector.broadcast %cst_184 : f32 to vector<8x128xf32>
        %201 = arith.mulf %200, %199 : vector<8x128xf32>
        %202 = arith.addf %196, %201 : vector<8x128xf32>
        %c0_185 = arith.constant 0 : index
        %c0_186 = arith.constant 0 : index
        %203 = vector.load %arg12[%c0_185, %c0_186] : memref<8x128xf32, #tpu.memory_space<vmem>>, vector<8x128xf32>
        tpu.vector_store %arg12[%c0_185, %c0_186], %202 {strides = array<i32>} : memref<8x128xf32, #tpu.memory_space<vmem>>, vector<8x128xf32>,
      } else {
      }
    } else {
    }
    %c0_i32_14 = arith.constant 0 : i32
    %15 = arith.cmpi sgt, %arg1, %c0_i32_14 : i32
    %16 = arith.extui %15 : i1 to i32
    %c0_i32_15 = arith.constant 0 : i32
    %17 = arith.cmpi ne, %16, %c0_i32_15 : i32
    scf.if %17 {
      %c0_173 = arith.constant 0 : index
      %c0_174 = arith.constant 0 : index
      %186 = vector.load %arg12[%c0_173, %c0_174] : memref<8x128xf32, #tpu.memory_space<vmem>>, vector<8x128xf32>
      %cst_175 = arith.constant 5.000000e-01 : f32
      %187 = vector.broadcast %cst_175 : f32 to vector<8x128xf32>
      %188 = arith.mulf %187, %186 : vector<8x128xf32>
      %c0_176 = arith.constant 0 : index
      %c0_177 = arith.constant 0 : index
      %189 = vector.load %arg8[%c0_176, %c0_177] : memref<1x128xf32, #tpu.memory_space<vmem>>, vector<1x128xf32>
      %190 = vector.broadcast %189 : vector<1x128xf32> to vector<8x128xf32>
      %191 = arith.addf %11, %190 : vector<8x128xf32>
      %cst_178 = arith.constant 5.000000e-01 : f32
      %192 = vector.broadcast %cst_178 : f32 to vector<8x128xf32>
      %193 = arith.mulf %192, %191 : vector<8x128xf32>
      %194 = arith.addf %188, %193 : vector<8x128xf32>
      %c0_179 = arith.constant 0 : index
      %c0_180 = arith.constant 0 : index
      %195 = vector.load %arg12[%c0_179, %c0_180] : memref<8x128xf32, #tpu.memory_space<vmem>>, vector<8x128xf32>
      tpu.vector_store %arg12[%c0_179, %c0_180], %194 {strides = array<i32>} : memref<8x128xf32, #tpu.memory_space<vmem>>, vector<8x128xf32>,
    } else {
    }
    %c0_16 = arith.constant 0 : index
    %c0_17 = arith.constant 0 : index
    %18 = vector.load %arg12[%c0_16, %c0_17] : memref<8x128xf32, #tpu.memory_space<vmem>>, vector<8x128xf32>
    %19 = math.tanh %18 : vector<8x128xf32>
    %c0_18 = arith.constant 0 : index
    %c128 = arith.constant 128 : index
    %20 = vector.load %arg14[%c0_18, %c128] : memref<8x256xf32, #tpu.memory_space<vmem>>, vector<8x128xf32>
    tpu.vector_store %arg14[%c0_18, %c128], %19 {strides = array<i32>} : memref<8x256xf32, #tpu.memory_space<vmem>>, vector<8x128xf32>,
    %21 = arith.truncf %19 : vector<8x128xf32> to vector<8x128xbf16>
    %c0_19 = arith.constant 0 : index
    %c0_20 = arith.constant 0 : index
    %22 = vector.load %arg9[%c0_19, %c0_20] : memref<128x128xbf16, #tpu.memory_space<vmem>>, vector<128x128xbf16>
    %cst_21 = arith.constant dense<0.000000e+00> : vector<8x128xf32>
    %23 = tpu.matmul %21, %22, %cst_21 {dimension_numbers = #tpu.dot_dimension_numbers<[1], [0], [0], [1], [0, 0, 1, 1], [], []>} : vector<8x128xbf16>, vector<128x128xbf16>, vector<8x128xf32> -> vector<8x128xf32>
    %c0_22 = arith.constant 0 : index
    %c0_23 = arith.constant 0 : index
    %24 = vector.load %arg10[%c0_22, %c0_23] : memref<1x128xf32, #tpu.memory_space<vmem>>, vector<1x128xf32>
    %25 = vector.broadcast %24 : vector<1x128xf32> to vector<8x128xf32>
    %26 = arith.addf %23, %25 : vector<8x128xf32>
    %27 = math.tanh %26 : vector<8x128xf32>
    %c0_24 = arith.constant 0 : index
    %c0_25 = arith.constant 0 : index
    %c0_26 = arith.constant 0 : index
    %28 = vector.load %arg11[%c0_24, %c0_25, %c0_26] : memref<5x8x128xf32, #tpu.memory_space<vmem>>, vector<1x8x128xf32>
    %29 = vector.shape_cast %28 : vector<1x8x128xf32> to vector<8x128xf32>
    %30 = vector.shape_cast %27 : vector<8x128xf32> to vector<1x8x128xf32>
    tpu.vector_store %arg11[%c0_24, %c0_25, %c0_26], %30 {strides = array<i32>} : memref<5x8x128xf32, #tpu.memory_space<vmem>>, vector<1x8x128xf32>,
    %c0_27 = arith.constant 0 : index
    %c0_28 = arith.constant 0 : index
    %c0_29 = arith.constant 0 : index
    %31 = vector.load %arg5[%c0_27, %c0_28, %c0_29] : memref<5x8x128xf32, #tpu.memory_space<vmem>>, vector<1x8x128xf32>
    %32 = vector.shape_cast %31 : vector<1x8x128xf32> to vector<8x128xf32>
    %33 = arith.subf %27, %32 : vector<8x128xf32>
    %34 = arith.mulf %33, %33 : vector<8x128xf32>
    %cst_30 = arith.constant dense<0.000000e+00> : vector<8xf32>
    %35 = vector.multi_reduction <add>, %34, %cst_30 [1] : vector<8x128xf32> to vector<8xf32>
    %36 = vector.shape_cast %35 : vector<8xf32> to vector<8x1xf32>
    %c0_31 = arith.constant 0 : index
    %c0_32 = arith.constant 0 : index
    %37 = vector.load %arg13[%c0_31, %c0_32] : memref<8x128xf32, #tpu.memory_space<vmem>>, vector<8x1xf32>
    tpu.vector_store %arg13[%c0_31, %c0_32], %36 {strides = array<i32>} : memref<8x128xf32, #tpu.memory_space<vmem>>, vector<8x1xf32>,
    %c1 = arith.constant 1 : index
    %c0_33 = arith.constant 0 : index
    %c0_34 = arith.constant 0 : index
    %38 = vector.load %arg4[%c1, %c0_33, %c0_34] : memref<5x8x128xf32, #tpu.memory_space<vmem>>, vector<1x8x128xf32>
    %39 = vector.shape_cast %38 : vector<1x8x128xf32> to vector<8x128xf32>
    %c0_35 = arith.constant 0 : index
    %c0_36 = arith.constant 0 : index
    %40 = vector.load %arg14[%c0_35, %c0_36] : memref<8x256xf32, #tpu.memory_space<vmem>>, vector<8x128xf32>
    tpu.vector_store %arg14[%c0_35, %c0_36], %39 {strides = array<i32>} : memref<8x256xf32, #tpu.memory_space<vmem>>, vector<8x128xf32>,
    %c0_37 = arith.constant 0 : index
    %c0_38 = arith.constant 0 : index
    %41 = vector.load %arg14[%c0_37, %c0_38] : memref<8x256xf32, #tpu.memory_space<vmem>>, vector<8x256xf32>
    %42 = arith.truncf %41 : vector<8x256xf32> to vector<8x256xbf16>
    %c0_39 = arith.constant 0 : index
    %c0_40 = arith.constant 0 : index
    %43 = vector.load %arg6[%c0_39, %c0_40] : memref<256x128xbf16, #tpu.memory_space<vmem>>, vector<256x128xbf16>
    %cst_41 = arith.constant dense<0.000000e+00> : vector<8x128xf32>
    %44 = tpu.matmul %42, %43, %cst_41 {dimension_numbers = #tpu.dot_dimension_numbers<[1], [0], [0], [1], [0, 0, 1, 1], [], []>} : vector<8x256xbf16>, vector<256x128xbf16>, vector<8x128xf32> -> vector<8x128xf32>
    %c0_42 = arith.constant 0 : index
    %c0_43 = arith.constant 0 : index
    %45 = vector.load %arg12[%c0_42, %c0_43] : memref<8x128xf32, #tpu.memory_space<vmem>>, vector<8x128xf32>
    %cst_44 = arith.constant 5.000000e-01 : f32
    %46 = vector.broadcast %cst_44 : f32 to vector<8x128xf32>
    %47 = arith.mulf %46, %45 : vector<8x128xf32>
    %c0_45 = arith.constant 0 : index
    %c0_46 = arith.constant 0 : index
    %48 = vector.load %arg8[%c0_45, %c0_46] : memref<1x128xf32, #tpu.memory_space<vmem>>, vector<1x128xf32>
    %49 = vector.broadcast %48 : vector<1x128xf32> to vector<8x128xf32>
    %50 = arith.addf %44, %49 : vector<8x128xf32>
    %cst_47 = arith.constant 5.000000e-01 : f32
    %51 = vector.broadcast %cst_47 : f32 to vector<8x128xf32>
    %52 = arith.mulf %51, %50 : vector<8x128xf32>
    %53 = arith.addf %47, %52 : vector<8x128xf32>
    %c0_48 = arith.constant 0 : index
    %c0_49 = arith.constant 0 : index
    %54 = vector.load %arg12[%c0_48, %c0_49] : memref<8x128xf32, #tpu.memory_space<vmem>>, vector<8x128xf32>
    tpu.vector_store %arg12[%c0_48, %c0_49], %53 {strides = array<i32>} : memref<8x128xf32, #tpu.memory_space<vmem>>, vector<8x128xf32>,
    %c0_50 = arith.constant 0 : index
    %c0_51 = arith.constant 0 : index
    %55 = vector.load %arg12[%c0_50, %c0_51] : memref<8x128xf32, #tpu.memory_space<vmem>>, vector<8x128xf32>
    %56 = math.tanh %55 : vector<8x128xf32>
    %c0_52 = arith.constant 0 : index
    %c128_53 = arith.constant 128 : index
    %57 = vector.load %arg14[%c0_52, %c128_53] : memref<8x256xf32, #tpu.memory_space<vmem>>, vector<8x128xf32>
    tpu.vector_store %arg14[%c0_52, %c128_53], %56 {strides = array<i32>} : memref<8x256xf32, #tpu.memory_space<vmem>>, vector<8x128xf32>,
    %58 = arith.truncf %56 : vector<8x128xf32> to vector<8x128xbf16>
    %c0_54 = arith.constant 0 : index
    %c0_55 = arith.constant 0 : index
    %59 = vector.load %arg9[%c0_54, %c0_55] : memref<128x128xbf16, #tpu.memory_space<vmem>>, vector<128x128xbf16>
    %cst_56 = arith.constant dense<0.000000e+00> : vector<8x128xf32>
    %60 = tpu.matmul %58, %59, %cst_56 {dimension_numbers = #tpu.dot_dimension_numbers<[1], [0], [0], [1], [0, 0, 1, 1], [], []>} : vector<8x128xbf16>, vector<128x128xbf16>, vector<8x128xf32> -> vector<8x128xf32>
    %c0_57 = arith.constant 0 : index
    %c0_58 = arith.constant 0 : index
    %61 = vector.load %arg10[%c0_57, %c0_58] : memref<1x128xf32, #tpu.memory_space<vmem>>, vector<1x128xf32>
    %62 = vector.broadcast %61 : vector<1x128xf32> to vector<8x128xf32>
    %63 = arith.addf %60, %62 : vector<8x128xf32>
    %64 = math.tanh %63 : vector<8x128xf32>
    %c1_59 = arith.constant 1 : index
    %c0_60 = arith.constant 0 : index
    %c0_61 = arith.constant 0 : index
    %65 = vector.load %arg11[%c1_59, %c0_60, %c0_61] : memref<5x8x128xf32, #tpu.memory_space<vmem>>, vector<1x8x128xf32>
    %66 = vector.shape_cast %65 : vector<1x8x128xf32> to vector<8x128xf32>
    %67 = vector.shape_cast %64 : vector<8x128xf32> to vector<1x8x128xf32>
    tpu.vector_store %arg11[%c1_59, %c0_60, %c0_61], %67 {strides = array<i32>} : memref<5x8x128xf32, #tpu.memory_space<vmem>>, vector<1x8x128xf32>,
    %c1_62 = arith.constant 1 : index
    %c0_63 = arith.constant 0 : index
    %c0_64 = arith.constant 0 : index
    %68 = vector.load %arg5[%c1_62, %c0_63, %c0_64] : memref<5x8x128xf32, #tpu.memory_space<vmem>>, vector<1x8x128xf32>
    %69 = vector.shape_cast %68 : vector<1x8x128xf32> to vector<8x128xf32>
    %70 = arith.subf %64, %69 : vector<8x128xf32>
    %71 = arith.mulf %70, %70 : vector<8x128xf32>
    %cst_65 = arith.constant dense<0.000000e+00> : vector<8xf32>
    %72 = vector.multi_reduction <add>, %71, %cst_65 [1] : vector<8x128xf32> to vector<8xf32>
    %73 = vector.shape_cast %72 : vector<8xf32> to vector<8x1xf32>
    %c0_66 = arith.constant 0 : index
    %c1_67 = arith.constant 1 : index
    %74 = vector.load %arg13[%c0_66, %c1_67] : memref<8x128xf32, #tpu.memory_space<vmem>>, vector<8x1xf32>
    tpu.vector_store %arg13[%c0_66, %c1_67], %73 {strides = array<i32>} : memref<8x128xf32, #tpu.memory_space<vmem>>, vector<8x1xf32>,
    %c2 = arith.constant 2 : index
    %c0_68 = arith.constant 0 : index
    %c0_69 = arith.constant 0 : index
    %75 = vector.load %arg4[%c2, %c0_68, %c0_69] : memref<5x8x128xf32, #tpu.memory_space<vmem>>, vector<1x8x128xf32>
    %76 = vector.shape_cast %75 : vector<1x8x128xf32> to vector<8x128xf32>
    %c0_70 = arith.constant 0 : index
    %c0_71 = arith.constant 0 : index
    %77 = vector.load %arg14[%c0_70, %c0_71] : memref<8x256xf32, #tpu.memory_space<vmem>>, vector<8x128xf32>
    tpu.vector_store %arg14[%c0_70, %c0_71], %76 {strides = array<i32>} : memref<8x256xf32, #tpu.memory_space<vmem>>, vector<8x128xf32>,
    %c0_72 = arith.constant 0 : index
    %c0_73 = arith.constant 0 : index
    %78 = vector.load %arg14[%c0_72, %c0_73] : memref<8x256xf32, #tpu.memory_space<vmem>>, vector<8x256xf32>
    %79 = arith.truncf %78 : vector<8x256xf32> to vector<8x256xbf16>
    %c0_74 = arith.constant 0 : index
    %c0_75 = arith.constant 0 : index
    %80 = vector.load %arg6[%c0_74, %c0_75] : memref<256x128xbf16, #tpu.memory_space<vmem>>, vector<256x128xbf16>
    %cst_76 = arith.constant dense<0.000000e+00> : vector<8x128xf32>
    %81 = tpu.matmul %79, %80, %cst_76 {dimension_numbers = #tpu.dot_dimension_numbers<[1], [0], [0], [1], [0, 0, 1, 1], [], []>} : vector<8x256xbf16>, vector<256x128xbf16>, vector<8x128xf32> -> vector<8x128xf32>
    %c0_77 = arith.constant 0 : index
    %c0_78 = arith.constant 0 : index
    %82 = vector.load %arg12[%c0_77, %c0_78] : memref<8x128xf32, #tpu.memory_space<vmem>>, vector<8x128xf32>
    %cst_79 = arith.constant 5.000000e-01 : f32
    %83 = vector.broadcast %cst_79 : f32 to vector<8x128xf32>
    %84 = arith.mulf %83, %82 : vector<8x128xf32>
    %c0_80 = arith.constant 0 : index
    %c0_81 = arith.constant 0 : index
    %85 = vector.load %arg8[%c0_80, %c0_81] : memref<1x128xf32, #tpu.memory_space<vmem>>, vector<1x128xf32>
    %86 = vector.broadcast %85 : vector<1x128xf32> to vector<8x128xf32>
    %87 = arith.addf %81, %86 : vector<8x128xf32>
    %cst_82 = arith.constant 5.000000e-01 : f32
    %88 = vector.broadcast %cst_82 : f32 to vector<8x128xf32>
    %89 = arith.mulf %88, %87 : vector<8x128xf32>
    %90 = arith.addf %84, %89 : vector<8x128xf32>
    %c0_83 = arith.constant 0 : index
    %c0_84 = arith.constant 0 : index
    %91 = vector.load %arg12[%c0_83, %c0_84] : memref<8x128xf32, #tpu.memory_space<vmem>>, vector<8x128xf32>
    tpu.vector_store %arg12[%c0_83, %c0_84], %90 {strides = array<i32>} : memref<8x128xf32, #tpu.memory_space<vmem>>, vector<8x128xf32>,
    %c0_85 = arith.constant 0 : index
    %c0_86 = arith.constant 0 : index
    %92 = vector.load %arg12[%c0_85, %c0_86] : memref<8x128xf32, #tpu.memory_space<vmem>>, vector<8x128xf32>
    %93 = math.tanh %92 : vector<8x128xf32>
    %c0_87 = arith.constant 0 : index
    %c128_88 = arith.constant 128 : index
    %94 = vector.load %arg14[%c0_87, %c128_88] : memref<8x256xf32, #tpu.memory_space<vmem>>, vector<8x128xf32>
    tpu.vector_store %arg14[%c0_87, %c128_88], %93 {strides = array<i32>} : memref<8x256xf32, #tpu.memory_space<vmem>>, vector<8x128xf32>,
    %95 = arith.truncf %93 : vector<8x128xf32> to vector<8x128xbf16>
    %c0_89 = arith.constant 0 : index
    %c0_90 = arith.constant 0 : index
    %96 = vector.load %arg9[%c0_89, %c0_90] : memref<128x128xbf16, #tpu.memory_space<vmem>>, vector<128x128xbf16>
    %cst_91 = arith.constant dense<0.000000e+00> : vector<8x128xf32>
    %97 = tpu.matmul %95, %96, %cst_91 {dimension_numbers = #tpu.dot_dimension_numbers<[1], [0], [0], [1], [0, 0, 1, 1], [], []>} : vector<8x128xbf16>, vector<128x128xbf16>, vector<8x128xf32> -> vector<8x128xf32>
    %c0_92 = arith.constant 0 : index
    %c0_93 = arith.constant 0 : index
    %98 = vector.load %arg10[%c0_92, %c0_93] : memref<1x128xf32, #tpu.memory_space<vmem>>, vector<1x128xf32>
    %99 = vector.broadcast %98 : vector<1x128xf32> to vector<8x128xf32>
    %100 = arith.addf %97, %99 : vector<8x128xf32>
    %101 = math.tanh %100 : vector<8x128xf32>
    %c2_94 = arith.constant 2 : index
    %c0_95 = arith.constant 0 : index
    %c0_96 = arith.constant 0 : index
    %102 = vector.load %arg11[%c2_94, %c0_95, %c0_96] : memref<5x8x128xf32, #tpu.memory_space<vmem>>, vector<1x8x128xf32>
    %103 = vector.shape_cast %102 : vector<1x8x128xf32> to vector<8x128xf32>
    %104 = vector.shape_cast %101 : vector<8x128xf32> to vector<1x8x128xf32>
    tpu.vector_store %arg11[%c2_94, %c0_95, %c0_96], %104 {strides = array<i32>} : memref<5x8x128xf32, #tpu.memory_space<vmem>>, vector<1x8x128xf32>,
    %c2_97 = arith.constant 2 : index
    %c0_98 = arith.constant 0 : index
    %c0_99 = arith.constant 0 : index
    %105 = vector.load %arg5[%c2_97, %c0_98, %c0_99] : memref<5x8x128xf32, #tpu.memory_space<vmem>>, vector<1x8x128xf32>
    %106 = vector.shape_cast %105 : vector<1x8x128xf32> to vector<8x128xf32>
    %107 = arith.subf %101, %106 : vector<8x128xf32>
    %108 = arith.mulf %107, %107 : vector<8x128xf32>
    %cst_100 = arith.constant dense<0.000000e+00> : vector<8xf32>
    %109 = vector.multi_reduction <add>, %108, %cst_100 [1] : vector<8x128xf32> to vector<8xf32>
    %110 = vector.shape_cast %109 : vector<8xf32> to vector<8x1xf32>
    %c0_101 = arith.constant 0 : index
    %c2_102 = arith.constant 2 : index
    %111 = vector.load %arg13[%c0_101, %c2_102] : memref<8x128xf32, #tpu.memory_space<vmem>>, vector<8x1xf32>
    tpu.vector_store %arg13[%c0_101, %c2_102], %110 {strides = array<i32>} : memref<8x128xf32, #tpu.memory_space<vmem>>, vector<8x1xf32>,
    %c3 = arith.constant 3 : index
    %c0_103 = arith.constant 0 : index
    %c0_104 = arith.constant 0 : index
    %112 = vector.load %arg4[%c3, %c0_103, %c0_104] : memref<5x8x128xf32, #tpu.memory_space<vmem>>, vector<1x8x128xf32>
    %113 = vector.shape_cast %112 : vector<1x8x128xf32> to vector<8x128xf32>
    %c0_105 = arith.constant 0 : index
    %c0_106 = arith.constant 0 : index
    %114 = vector.load %arg14[%c0_105, %c0_106] : memref<8x256xf32, #tpu.memory_space<vmem>>, vector<8x128xf32>
    tpu.vector_store %arg14[%c0_105, %c0_106], %113 {strides = array<i32>} : memref<8x256xf32, #tpu.memory_space<vmem>>, vector<8x128xf32>,
    %c0_107 = arith.constant 0 : index
    %c0_108 = arith.constant 0 : index
    %115 = vector.load %arg14[%c0_107, %c0_108] : memref<8x256xf32, #tpu.memory_space<vmem>>, vector<8x256xf32>
    %116 = arith.truncf %115 : vector<8x256xf32> to vector<8x256xbf16>
    %c0_109 = arith.constant 0 : index
    %c0_110 = arith.constant 0 : index
    %117 = vector.load %arg6[%c0_109, %c0_110] : memref<256x128xbf16, #tpu.memory_space<vmem>>, vector<256x128xbf16>
    %cst_111 = arith.constant dense<0.000000e+00> : vector<8x128xf32>
    %118 = tpu.matmul %116, %117, %cst_111 {dimension_numbers = #tpu.dot_dimension_numbers<[1], [0], [0], [1], [0, 0, 1, 1], [], []>} : vector<8x256xbf16>, vector<256x128xbf16>, vector<8x128xf32> -> vector<8x128xf32>
    %c0_112 = arith.constant 0 : index
    %c0_113 = arith.constant 0 : index
    %119 = vector.load %arg12[%c0_112, %c0_113] : memref<8x128xf32, #tpu.memory_space<vmem>>, vector<8x128xf32>
    %cst_114 = arith.constant 5.000000e-01 : f32
    %120 = vector.broadcast %cst_114 : f32 to vector<8x128xf32>
    %121 = arith.mulf %120, %119 : vector<8x128xf32>
    %c0_115 = arith.constant 0 : index
    %c0_116 = arith.constant 0 : index
    %122 = vector.load %arg8[%c0_115, %c0_116] : memref<1x128xf32, #tpu.memory_space<vmem>>, vector<1x128xf32>
    %123 = vector.broadcast %122 : vector<1x128xf32> to vector<8x128xf32>
    %124 = arith.addf %118, %123 : vector<8x128xf32>
    %cst_117 = arith.constant 5.000000e-01 : f32
    %125 = vector.broadcast %cst_117 : f32 to vector<8x128xf32>
    %126 = arith.mulf %125, %124 : vector<8x128xf32>
    %127 = arith.addf %121, %126 : vector<8x128xf32>
    %c0_118 = arith.constant 0 : index
    %c0_119 = arith.constant 0 : index
    %128 = vector.load %arg12[%c0_118, %c0_119] : memref<8x128xf32, #tpu.memory_space<vmem>>, vector<8x128xf32>
    tpu.vector_store %arg12[%c0_118, %c0_119], %127 {strides = array<i32>} : memref<8x128xf32, #tpu.memory_space<vmem>>, vector<8x128xf32>,
    %c0_120 = arith.constant 0 : index
    %c0_121 = arith.constant 0 : index
    %129 = vector.load %arg12[%c0_120, %c0_121] : memref<8x128xf32, #tpu.memory_space<vmem>>, vector<8x128xf32>
    %130 = math.tanh %129 : vector<8x128xf32>
    %c0_122 = arith.constant 0 : index
    %c128_123 = arith.constant 128 : index
    %131 = vector.load %arg14[%c0_122, %c128_123] : memref<8x256xf32, #tpu.memory_space<vmem>>, vector<8x128xf32>
    tpu.vector_store %arg14[%c0_122, %c128_123], %130 {strides = array<i32>} : memref<8x256xf32, #tpu.memory_space<vmem>>, vector<8x128xf32>,
    %132 = arith.truncf %130 : vector<8x128xf32> to vector<8x128xbf16>
    %c0_124 = arith.constant 0 : index
    %c0_125 = arith.constant 0 : index
    %133 = vector.load %arg9[%c0_124, %c0_125] : memref<128x128xbf16, #tpu.memory_space<vmem>>, vector<128x128xbf16>
    %cst_126 = arith.constant dense<0.000000e+00> : vector<8x128xf32>
    %134 = tpu.matmul %132, %133, %cst_126 {dimension_numbers = #tpu.dot_dimension_numbers<[1], [0], [0], [1], [0, 0, 1, 1], [], []>} : vector<8x128xbf16>, vector<128x128xbf16>, vector<8x128xf32> -> vector<8x128xf32>
    %c0_127 = arith.constant 0 : index
    %c0_128 = arith.constant 0 : index
    %135 = vector.load %arg10[%c0_127, %c0_128] : memref<1x128xf32, #tpu.memory_space<vmem>>, vector<1x128xf32>
    %136 = vector.broadcast %135 : vector<1x128xf32> to vector<8x128xf32>
    %137 = arith.addf %134, %136 : vector<8x128xf32>
    %138 = math.tanh %137 : vector<8x128xf32>
    %c3_129 = arith.constant 3 : index
    %c0_130 = arith.constant 0 : index
    %c0_131 = arith.constant 0 : index
    %139 = vector.load %arg11[%c3_129, %c0_130, %c0_131] : memref<5x8x128xf32, #tpu.memory_space<vmem>>, vector<1x8x128xf32>
    %140 = vector.shape_cast %139 : vector<1x8x128xf32> to vector<8x128xf32>
    %141 = vector.shape_cast %138 : vector<8x128xf32> to vector<1x8x128xf32>
    tpu.vector_store %arg11[%c3_129, %c0_130, %c0_131], %141 {strides = array<i32>} : memref<5x8x128xf32, #tpu.memory_space<vmem>>, vector<1x8x128xf32>,
    %c3_132 = arith.constant 3 : index
    %c0_133 = arith.constant 0 : index
    %c0_134 = arith.constant 0 : index
    %142 = vector.load %arg5[%c3_132, %c0_133, %c0_134] : memref<5x8x128xf32, #tpu.memory_space<vmem>>, vector<1x8x128xf32>
    %143 = vector.shape_cast %142 : vector<1x8x128xf32> to vector<8x128xf32>
    %144 = arith.subf %138, %143 : vector<8x128xf32>
    %145 = arith.mulf %144, %144 : vector<8x128xf32>
    %cst_135 = arith.constant dense<0.000000e+00> : vector<8xf32>
    %146 = vector.multi_reduction <add>, %145, %cst_135 [1] : vector<8x128xf32> to vector<8xf32>
    %147 = vector.shape_cast %146 : vector<8xf32> to vector<8x1xf32>
    %c0_136 = arith.constant 0 : index
    %c3_137 = arith.constant 3 : index
    %148 = vector.load %arg13[%c0_136, %c3_137] : memref<8x128xf32, #tpu.memory_space<vmem>>, vector<8x1xf32>
    tpu.vector_store %arg13[%c0_136, %c3_137], %147 {strides = array<i32>} : memref<8x128xf32, #tpu.memory_space<vmem>>, vector<8x1xf32>,
    %c4 = arith.constant 4 : index
    %c0_138 = arith.constant 0 : index
    %c0_139 = arith.constant 0 : index
    %149 = vector.load %arg4[%c4, %c0_138, %c0_139] : memref<5x8x128xf32, #tpu.memory_space<vmem>>, vector<1x8x128xf32>
    %150 = vector.shape_cast %149 : vector<1x8x128xf32> to vector<8x128xf32>
    %c0_140 = arith.constant 0 : index
    %c0_141 = arith.constant 0 : index
    %151 = vector.load %arg14[%c0_140, %c0_141] : memref<8x256xf32, #tpu.memory_space<vmem>>, vector<8x128xf32>
    tpu.vector_store %arg14[%c0_140, %c0_141], %150 {strides = array<i32>} : memref<8x256xf32, #tpu.memory_space<vmem>>, vector<8x128xf32>,
    %c0_142 = arith.constant 0 : index
    %c0_143 = arith.constant 0 : index
    %152 = vector.load %arg14[%c0_142, %c0_143] : memref<8x256xf32, #tpu.memory_space<vmem>>, vector<8x256xf32>
    %153 = arith.truncf %152 : vector<8x256xf32> to vector<8x256xbf16>
    %c0_144 = arith.constant 0 : index
    %c0_145 = arith.constant 0 : index
    %154 = vector.load %arg6[%c0_144, %c0_145] : memref<256x128xbf16, #tpu.memory_space<vmem>>, vector<256x128xbf16>
    %cst_146 = arith.constant dense<0.000000e+00> : vector<8x128xf32>
    %155 = tpu.matmul %153, %154, %cst_146 {dimension_numbers = #tpu.dot_dimension_numbers<[1], [0], [0], [1], [0, 0, 1, 1], [], []>} : vector<8x256xbf16>, vector<256x128xbf16>, vector<8x128xf32> -> vector<8x128xf32>
    %c0_147 = arith.constant 0 : index
    %c0_148 = arith.constant 0 : index
    %156 = vector.load %arg12[%c0_147, %c0_148] : memref<8x128xf32, #tpu.memory_space<vmem>>, vector<8x128xf32>
    %cst_149 = arith.constant 5.000000e-01 : f32
    %157 = vector.broadcast %cst_149 : f32 to vector<8x128xf32>
    %158 = arith.mulf %157, %156 : vector<8x128xf32>
    %c0_150 = arith.constant 0 : index
    %c0_151 = arith.constant 0 : index
    %159 = vector.load %arg8[%c0_150, %c0_151] : memref<1x128xf32, #tpu.memory_space<vmem>>, vector<1x128xf32>
    %160 = vector.broadcast %159 : vector<1x128xf32> to vector<8x128xf32>
    %161 = arith.addf %155, %160 : vector<8x128xf32>
    %cst_152 = arith.constant 5.000000e-01 : f32
    %162 = vector.broadcast %cst_152 : f32 to vector<8x128xf32>
    %163 = arith.mulf %162, %161 : vector<8x128xf32>
    %164 = arith.addf %158, %163 : vector<8x128xf32>
    %c0_153 = arith.constant 0 : index
    %c0_154 = arith.constant 0 : index
    %165 = vector.load %arg12[%c0_153, %c0_154] : memref<8x128xf32, #tpu.memory_space<vmem>>, vector<8x128xf32>
    tpu.vector_store %arg12[%c0_153, %c0_154], %164 {strides = array<i32>} : memref<8x128xf32, #tpu.memory_space<vmem>>, vector<8x128xf32>,
    %c0_155 = arith.constant 0 : index
    %c0_156 = arith.constant 0 : index
    %166 = vector.load %arg12[%c0_155, %c0_156] : memref<8x128xf32, #tpu.memory_space<vmem>>, vector<8x128xf32>
    %167 = math.tanh %166 : vector<8x128xf32>
    %c0_157 = arith.constant 0 : index
    %c128_158 = arith.constant 128 : index
    %168 = vector.load %arg14[%c0_157, %c128_158] : memref<8x256xf32, #tpu.memory_space<vmem>>, vector<8x128xf32>
    tpu.vector_store %arg14[%c0_157, %c128_158], %167 {strides = array<i32>} : memref<8x256xf32, #tpu.memory_space<vmem>>, vector<8x128xf32>,
    %169 = arith.truncf %167 : vector<8x128xf32> to vector<8x128xbf16>
    %c0_159 = arith.constant 0 : index
    %c0_160 = arith.constant 0 : index
    %170 = vector.load %arg9[%c0_159, %c0_160] : memref<128x128xbf16, #tpu.memory_space<vmem>>, vector<128x128xbf16>
    %cst_161 = arith.constant dense<0.000000e+00> : vector<8x128xf32>
    %171 = tpu.matmul %169, %170, %cst_161 {dimension_numbers = #tpu.dot_dimension_numbers<[1], [0], [0], [1], [0, 0, 1, 1], [], []>} : vector<8x128xbf16>, vector<128x128xbf16>, vector<8x128xf32> -> vector<8x128xf32>
    %c0_162 = arith.constant 0 : index
    %c0_163 = arith.constant 0 : index
    %172 = vector.load %arg10[%c0_162, %c0_163] : memref<1x128xf32, #tpu.memory_space<vmem>>, vector<1x128xf32>
    %173 = vector.broadcast %172 : vector<1x128xf32> to vector<8x128xf32>
    %174 = arith.addf %171, %173 : vector<8x128xf32>
    %175 = math.tanh %174 : vector<8x128xf32>
    %c4_164 = arith.constant 4 : index
    %c0_165 = arith.constant 0 : index
    %c0_166 = arith.constant 0 : index
    %176 = vector.load %arg11[%c4_164, %c0_165, %c0_166] : memref<5x8x128xf32, #tpu.memory_space<vmem>>, vector<1x8x128xf32>
    %177 = vector.shape_cast %176 : vector<1x8x128xf32> to vector<8x128xf32>
    %178 = vector.shape_cast %175 : vector<8x128xf32> to vector<1x8x128xf32>
    tpu.vector_store %arg11[%c4_164, %c0_165, %c0_166], %178 {strides = array<i32>} : memref<5x8x128xf32, #tpu.memory_space<vmem>>, vector<1x8x128xf32>,
    %c4_167 = arith.constant 4 : index
    %c0_168 = arith.constant 0 : index
    %c0_169 = arith.constant 0 : index
    %179 = vector.load %arg5[%c4_167, %c0_168, %c0_169] : memref<5x8x128xf32, #tpu.memory_space<vmem>>, vector<1x8x128xf32>
    %180 = vector.shape_cast %179 : vector<1x8x128xf32> to vector<8x128xf32>
    %181 = arith.subf %175, %180 : vector<8x128xf32>
    %182 = arith.mulf %181, %181 : vector<8x128xf32>
    %cst_170 = arith.constant dense<0.000000e+00> : vector<8xf32>
    %183 = vector.multi_reduction <add>, %182, %cst_170 [1] : vector<8x128xf32> to vector<8xf32>
    %184 = vector.shape_cast %183 : vector<8xf32> to vector<8x1xf32>
    %c0_171 = arith.constant 0 : index
    %c4_172 = arith.constant 4 : index
    %185 = vector.load %arg13[%c0_171, %c4_172] : memref<8x128xf32, #tpu.memory_space<vmem>>, vector<8x1xf32>
    tpu.vector_store %arg13[%c0_171, %c4_172], %184 {strides = array<i32>} : memref<8x128xf32, #tpu.memory_space<vmem>>, vector<8x1xf32>,
    return
  }
  func.func @transform_0(%arg0: i32, %arg1: i32, %arg2: memref<1xi32, #tpu.memory_space<smem>>) -> (i32, i32) {
    %c0_i32 = arith.constant 0 : i32
    %c0_i32_0 = arith.constant 0 : i32
    return %arg0, %c0_i32 : i32, i32
  }
  func.func @transform_1(%arg0: i32, %arg1: i32, %arg2: memref<1xi32, #tpu.memory_space<smem>>) -> (i32, i32, i32) {
    %c0_i32 = arith.constant 0 : i32
    %c0_i32_0 = arith.constant 0 : i32
    return %arg1, %arg0, %c0_i32 : i32, i32, i32
  }
  func.func @transform_2(%arg0: i32, %arg1: i32, %arg2: memref<1xi32, #tpu.memory_space<smem>>) -> (i32, i32, i32) {
    %c0_i32 = arith.constant 0 : i32
    %c0_i32_0 = arith.constant 0 : i32
    return %arg1, %arg0, %c0_i32 : i32, i32, i32
  }
  func.func @transform_3(%arg0: i32, %arg1: i32, %arg2: memref<1xi32, #tpu.memory_space<smem>>) -> (i32, i32) {
    %c0_i32 = arith.constant 0 : i32
    %c0_i32_0 = arith.constant 0 : i32
    %c0_i32_1 = arith.constant 0 : i32
    return %c0_i32, %c0_i32_0 : i32, i32
  }
  func.func @transform_4(%arg0: i32, %arg1: i32, %arg2: memref<1xi32, #tpu.memory_space<smem>>) -> (i32, i32) {
    %c0_i32 = arith.constant 0 : i32
    %c0_i32_0 = arith.constant 0 : i32
    %c0_i32_1 = arith.constant 0 : i32
    return %c0_i32, %c0_i32_0 : i32, i32
  }
  func.func @transform_5(%arg0: i32, %arg1: i32, %arg2: memref<1xi32, #tpu.memory_space<smem>>) -> (i32, i32) {
    %c0_i32 = arith.constant 0 : i32
    %c0_i32_0 = arith.constant 0 : i32
    %c0_i32_1 = arith.constant 0 : i32
    return %c0_i32, %c0_i32_0 : i32, i32
  }
  func.func @transform_6(%arg0: i32, %arg1: i32, %arg2: memref<1xi32, #tpu.memory_space<smem>>) -> (i32, i32) {
    %c0_i32 = arith.constant 0 : i32
    %c0_i32_0 = arith.constant 0 : i32
    %c0_i32_1 = arith.constant 0 : i32
    return %c0_i32, %c0_i32_0 : i32, i32
  }
  func.func @transform_7(%arg0: i32, %arg1: i32, %arg2: memref<1xi32, #tpu.memory_space<smem>>) -> (i32, i32) {
    %c0_i32 = arith.constant 0 : i32
    %c0_i32_0 = arith.constant 0 : i32
    %c0_i32_1 = arith.constant 0 : i32
    return %c0_i32, %c0_i32_0 : i32, i32
  }
  func.func @transform_8(%arg0: i32, %arg1: i32, %arg2: memref<1xi32, #tpu.memory_space<smem>>) -> (i32, i32, i32) {
    %c0_i32 = arith.constant 0 : i32
    %c0_i32_0 = arith.constant 0 : i32
    return %arg1, %arg0, %c0_i32 : i32, i32, i32
  }
  func.func @transform_9(%arg0: i32, %arg1: i32, %arg2: memref<1xi32, #tpu.memory_space<smem>>) -> (i32, i32) {
    %c0_i32 = arith.constant 0 : i32
    %c0_i32_0 = arith.constant 0 : i32
    return %arg0, %c0_i32 : i32, i32
  }
  func.func @transform_10(%arg0: i32, %arg1: i32, %arg2: memref<1xi32, #tpu.memory_space<smem>>) -> (i32, i32) {
    %c0_i32 = arith.constant 0 : i32
    return %arg0, %arg1 : i32, i32
  }
}

</mosaic_0001>

<llo_original>
// kernel: ctrnn_sequence.1
$region0: #{ctrnn_sequence.1}
  #allocation0 [shape = 'u32[]', space=smem, size = 0x4, offset = 0x4, fixed_abs, tag = 'smem constant byte address 0x4 - core index']
  #allocation1 [shape = 'u32[144,128]{1,0:T(1,128)}', space=vmem, size = 0x12000, scoped, tag = 'internal scratch']
  #allocation2 [shape = 'f32[8,256]{1,0:T(8,128)}', space=vmem, size = 0x2000, scoped, tag = 'scratch operand']
  #allocation3 [shape = 's32[1]{0}', space=sflag, size = 0x4, scoped, tag = 'scoped memory for ctrnn_sequence.1']
  #allocation4 [shape = 's32[1]{0:T(128)S(6)}', space=smem, size = 0x200, scoped, tag = 'prefetched SMEM operand 0']
  %s0 = inlined_call_operand.<no memory space> [shape: s32[1], index: 0, kind: input, shape index: {}]
  %s1 = inlined_call_operand.vmem [shape: f32[8,128], index: 1, kind: input, shape index: {}]
  %s2 = inlined_call_operand.hbm [shape: f32[5,8,128], index: 2, kind: input, shape index: {}]
  %s3 = inlined_call_operand.hbm [shape: f32[5,8,128], index: 3, kind: input, shape index: {}]
  %s4 = inlined_call_operand.hbm [shape: bf16[256,128], index: 4, kind: input, shape index: {}]
  %s5 = inlined_call_operand.vmem [shape: f32[1,128], index: 5, kind: input, shape index: {}]
  %s6 = inlined_call_operand.vmem [shape: f32[1,128], index: 6, kind: input, shape index: {}]
  %s7 = inlined_call_operand.hbm [shape: bf16[128,128], index: 7, kind: input, shape index: {}]
  %s8 = inlined_call_operand.vmem [shape: f32[1,128], index: 8, kind: input, shape index: {}]
  %s9 = inlined_call_operand.hbm [shape: f32[5,8,128], index: 9, kind: output, shape index: {0}]
  %s10 = inlined_call_operand.hbm [shape: f32[8,128], index: 10, kind: output, shape index: {1}]
  %s11 = inlined_call_operand.hbm [shape: f32[8,128], index: 11, kind: output, shape index: {2}]
  %12 = xla_tuple %s9, %s10, %s11
  %s13 = sld [smem:[#allocation0]]
  $region94: #{ctrnn_sequence.1} parent=0
    _
  %s15 = ssub.s32 1, %s13
  %s16 = scalar_select 0, %s15, %s13
  %17 = sst [smem:[#allocation4]] %s0
  $region1: #{ctrnn_sequence.1} parent=0
    #allocation5 [shape = 'u8[20480]{0}', space=vmem, size = 0x5000, scoped, tag = 'input window, operand 2, single buffered']
    #allocation6 [shape = 's32[1]{0}', space=sflag, size = 0x4, scoped, tag = 'scoped memory for ctrnn_sequence.1']
    #allocation7 [shape = 's32[1]{0}', space=sflag, size = 0x4, scoped, tag = 'scoped memory for ctrnn_sequence.1']
    #allocation8 [shape = 'u8[20480]{0}', space=vmem, size = 0x5000, scoped, tag = 'input window, operand 3, single buffered']
    #allocation9 [shape = 's32[1]{0}', space=sflag, size = 0x4, scoped, tag = 'scoped memory for ctrnn_sequence.1']
    #allocation10 [shape = 'u8[65536]{0}', space=vmem, size = 0x10000, scoped, tag = 'input window, operand 4, single buffered']
    #allocation11 [shape = 'u8[32768]{0}', space=vmem, size = 0x8000, scoped, tag = 'input window, operand 7, single buffered']
    #allocation12 [shape = 's32[1]{0}', space=sflag, size = 0x4, scoped, tag = 'scoped memory for ctrnn_sequence.1']
    #allocation13 [shape = 'u8[20480]{0}', space=vmem, size = 0x5000, scoped, tag = 'output window, operand 0, single buffered']
    #allocation14 [shape = 'u8[4096]{0}', space=vmem, size = 0x1000, scoped, tag = 'output window, operand 1, single buffered']
    #allocation15 [shape = 's32[1]{0}', space=sflag, size = 0x4, scoped, tag = 'scoped memory for ctrnn_sequence.1']
    #allocation16 [shape = 'u8[4096]{0}', space=vmem, size = 0x1000, scoped, tag = 'output window, operand 2, single buffered']
    %18 = vsyncpa [#allocation6], 0
    %19 = vsyncpa [#allocation9], 0
    %20 = vsyncpa [#allocation12], 0
    %21 = vsyncpa [#allocation7], 0
    %22 = vsyncpa [#allocation15], 0
    // Predicated region
    $region2: #{ctrnn_sequence.1} parent=1 // pred_check
      _
    $region3: #{ctrnn_sequence.1} parent=1 // pred_check_branch
      %24 = sbr.rel (0) target = $region5
    $region4: #{ctrnn_sequence.1} parent=1 // pred_region
      _
    $region5: #{ctrnn_sequence.1} parent=1 // pred_fallthru
      _
    // Predicated region
    $region6: #{ctrnn_sequence.1} parent=1 // pred_check
      _
    $region7: #{ctrnn_sequence.1} parent=1 // pred_check_branch
      %26 = sbr.rel (0) target = $region9
    $region8: #{ctrnn_sequence.1} parent=1 // pred_region
      %s28 = ssub.s32 640, 640
      %29 = vsyncadd [#allocation6], %s28
      %s30 = sshll.u32 [#allocation5], 4
      %s31 = int_to_ptr.vmem [resolvable:$true] %s30
      %36 = dma.hbm_to_vmem [thread:$0]  %s2, 640, %s31, [#allocation6], 128, 128, 8
    $region9: #{ctrnn_sequence.1} parent=1 // pred_fallthru
      _
    // Predicated region
    $region10: #{ctrnn_sequence.1} parent=1 // pred_check
      _
    $region11: #{ctrnn_sequence.1} parent=1 // pred_check_branch
      %38 = sbr.rel (0) target = $region13
    $region12: #{ctrnn_sequence.1} parent=1 // pred_region
      %s40 = ssub.s32 640, 640
      %41 = vsyncadd [#allocation9], %s40
      %s42 = sshll.u32 [#allocation8], 4
      %s43 = int_to_ptr.vmem [resolvable:$true] %s42
      %48 = dma.hbm_to_vmem [thread:$0]  %s3, 640, %s43, [#allocation9], 128, 128, 8
    $region13: #{ctrnn_sequence.1} parent=1 // pred_fallthru
      _
    // Predicated region
    $region14: #{ctrnn_sequence.1} parent=1 // pred_check
      _
    $region15: #{ctrnn_sequence.1} parent=1 // pred_check_branch
      %50 = sbr.rel (0) target = $region17
    $region16: #{ctrnn_sequence.1} parent=1 // pred_region
      %s52 = ssub.s32 2048, 2048
      %53 = vsyncadd [#allocation9], %s52
      %s54 = sshll.u32 [#allocation10], 4
      %s55 = int_to_ptr.vmem [resolvable:$true] %s54
      %60 = dma.hbm_to_vmem [thread:$0]  %s4, 2048, %s55, [#allocation9], 64, 64, 4
    $region17: #{ctrnn_sequence.1} parent=1 // pred_fallthru
      _
    // Predicated region
    $region18: #{ctrnn_sequence.1} parent=1 // pred_check
      _
    $region19: #{ctrnn_sequence.1} parent=1 // pred_check_branch
      %62 = sbr.rel (0) target = $region21
    $region20: #{ctrnn_sequence.1} parent=1 // pred_region
      _
    $region21: #{ctrnn_sequence.1} parent=1 // pred_fallthru
      _
    // Predicated region
    $region22: #{ctrnn_sequence.1} parent=1 // pred_check
      _
    $region23: #{ctrnn_sequence.1} parent=1 // pred_check_branch
      %64 = sbr.rel (0) target = $region25
    $region24: #{ctrnn_sequence.1} parent=1 // pred_region
      _
    $region25: #{ctrnn_sequence.1} parent=1 // pred_fallthru
      _
    // Predicated region
    $region26: #{ctrnn_sequence.1} parent=1 // pred_check
      _
    $region27: #{ctrnn_sequence.1} parent=1 // pred_check_branch
      %66 = sbr.rel (0) target = $region29
    $region28: #{ctrnn_sequence.1} parent=1 // pred_region
      %s68 = ssub.s32 1024, 1024
      %69 = vsyncadd [#allocation12], %s68
      %s70 = sshll.u32 [#allocation11], 4
      %s71 = int_to_ptr.vmem [resolvable:$true] %s70
      %76 = dma.hbm_to_vmem [thread:$0]  %s7, 1024, %s71, [#allocation12], 64, 64, 4
    $region29: #{ctrnn_sequence.1} parent=1 // pred_fallthru
      _
    // Predicated region
    $region30: #{ctrnn_sequence.1} parent=1 // pred_check
      _
    $region31: #{ctrnn_sequence.1} parent=1 // pred_check_branch
      %78 = sbr.rel (0) target = $region33
    $region32: #{ctrnn_sequence.1} parent=1 // pred_region
      _
    $region33: #{ctrnn_sequence.1} parent=1 // pred_fallthru
      _
    // Predicated region
    $region34: #{ctrnn_sequence.1} parent=1 // pred_check
      _
    $region35: #{ctrnn_sequence.1} parent=1 // pred_check_branch
      %80 = sbr.rel (0) target = $region37
    $region36: #{ctrnn_sequence.1} parent=1 // pred_region
      %81 = dma.done [#allocation6], 640
    $region37: #{ctrnn_sequence.1} parent=1 // pred_fallthru
      _
    // Predicated region
    $region38: #{ctrnn_sequence.1} parent=1 // pred_check
      _
    $region39: #{ctrnn_sequence.1} parent=1 // pred_check_branch
      %83 = sbr.rel (0) target = $region41
    $region40: #{ctrnn_sequence.1} parent=1 // pred_region
      %84 = dma.done [#allocation9], 640
    $region41: #{ctrnn_sequence.1} parent=1 // pred_fallthru
      _
    // Predicated region
    $region42: #{ctrnn_sequence.1} parent=1 // pred_check
      _
    $region43: #{ctrnn_sequence.1} parent=1 // pred_check_branch
      %86 = sbr.rel (0) target = $region45
    $region44: #{ctrnn_sequence.1} parent=1 // pred_region
      %87 = dma.done [#allocation9], 2048
    $region45: #{ctrnn_sequence.1} parent=1 // pred_fallthru
      _
    // Predicated region
    $region46: #{ctrnn_sequence.1} parent=1 // pred_check
      _
    $region47: #{ctrnn_sequence.1} parent=1 // pred_check_branch
      %89 = sbr.rel (0) target = $region49
    $region48: #{ctrnn_sequence.1} parent=1 // pred_region
      %90 = dma.done [#allocation12], 1024
    $region49: #{ctrnn_sequence.1} parent=1 // pred_fallthru
      _
    %92 = vst [vmem:[#allocation16] sm:$0xff] 0.0
    %p93 = scmp.eq.s32.totalorder 0, 0
    // Predicated region
    $region50: #{ctrnn_sequence.1} parent=1 // pred_check
      %p94 = pneg %p93
    $region51: #{ctrnn_sequence.1} parent=1 // pred_check_branch
      %96 = sbr.rel (%p94) target = $region53
    $region52: #{ctrnn_sequence.1} parent=1 // pred_region
      %s97 = sld [smem:[#allocation4]]
      %p98 = scmp.ne.s32.totalorder %s97, 0
      %v99 = vld [vmem:[%s1] sm:$0xff]
      %v100 = vtanh.pop %v99
      %s101 = scalar_select %p98, 1, 0
      %v102 = vstv %s101
      %vm103 = vcmp.eq.s32.totalorder %v102, 1
      %v104 = vsel %vm103, %v100, 0.0
      %105 = vst [vmem:[#allocation2 + $0x8] sm:$0xff] %v104
    $region53: #{ctrnn_sequence.1} parent=1 // pred_fallthru
      _
    %v106 = vld [vmem:[#allocation5] sm:$0xff]
    %107 = vst [vmem:[#allocation2] sm:$0xff] %v106
    %v108 = vld [vmem:[#allocation2] sm:$0xff]
    %v109 = vld [vmem:[#allocation2 + $0x8] sm:$0xff]
    %v110 = vpack.c.bf16 %v108, %v108
    %v111 = vpack.c.bf16 %v109, %v109
    %v112 = vld [vmem:[#allocation10] sm:$0xf]
    %v113 = vld [vmem:[#allocation10 + $0x4] sm:$0xf]
    %v114 = vld [vmem:[#allocation10 + $0x8] sm:$0xf]
    %v115 = vld [vmem:[#allocation10 + $0xc] sm:$0xf]
    %v116 = vld [vmem:[#allocation10 + $0x10] sm:$0xf]
    %v117 = vld [vmem:[#allocation10 + $0x14] sm:$0xf]
    %v118 = vld [vmem:[#allocation10 + $0x18] sm:$0xf]
    %v119 = vld [vmem:[#allocation10 + $0x1c] sm:$0xf]
    %v120 = vld [vmem:[#allocation10 + $0x20] sm:$0xf]
    %v121 = vld [vmem:[#allocation10 + $0x24] sm:$0xf]
    %v122 = vld [vmem:[#allocation10 + $0x28] sm:$0xf]
    %v123 = vld [vmem:[#allocation10 + $0x2c] sm:$0xf]
    %v124 = vld [vmem:[#allocation10 + $0x30] sm:$0xf]
    %v125 = vld [vmem:[#allocation10 + $0x34] sm:$0xf]
    %v126 = vld [vmem:[#allocation10 + $0x38] sm:$0xf]
    %v127 = vld [vmem:[#allocation10 + $0x3c] sm:$0xf]
    %v128 = vld [vmem:[#allocation10 + $0x40] sm:$0xf]
    %v129 = vld [vmem:[#allocation10 + $0x44] sm:$0xf]
    %v130 = vld [vmem:[#allocation10 + $0x48] sm:$0xf]
    %v131 = vld [vmem:[#allocation10 + $0x4c] sm:$0xf]
    %v132 = vld [vmem:[#allocation10 + $0x50] sm:$0xf]
    %v133 = vld [vmem:[#allocation10 + $0x54] sm:$0xf]
    %v134 = vld [vmem:[#allocation10 + $0x58] sm:$0xf]
    %v135 = vld [vmem:[#allocation10 + $0x5c] sm:$0xf]
    %v136 = vld [vmem:[#allocation10 + $0x60] sm:$0xf]
    %v137 = vld [vmem:[#allocation10 + $0x64] sm:$0xf]
    %v138 = vld [vmem:[#allocation10 + $0x68] sm:$0xf]
    %v139 = vld [vmem:[#allocation10 + $0x6c] sm:$0xf]
    %v140 = vld [vmem:[#allocation10 + $0x70] sm:$0xf]
    %v141 = vld [vmem:[#allocation10 + $0x74] sm:$0xf]
    %v142 = vld [vmem:[#allocation10 + $0x78] sm:$0xf]
    %v143 = vld [vmem:[#allocation10 + $0x7c] sm:$0xf]
    %v176 = vunpack.c.l.b16 %v112
    %v177 = vunpack.c.l.b16 %v113
    %v178 = vunpack.c.l.b16 %v114
    %v179 = vunpack.c.l.b16 %v115
    %v180 = vunpack.c.l.b16 %v116
    %v181 = vunpack.c.l.b16 %v117
    %v182 = vunpack.c.l.b16 %v118
    %v183 = vunpack.c.l.b16 %v119
    %v184 = vunpack.c.l.b16 %v120
    %v185 = vunpack.c.l.b16 %v121
    %v186 = vunpack.c.l.b16 %v122
    %v187 = vunpack.c.l.b16 %v123
    %v188 = vunpack.c.l.b16 %v124
    %v189 = vunpack.c.l.b16 %v125
    %v190 = vunpack.c.l.b16 %v126
    %v191 = vunpack.c.l.b16 %v127
    %v192 = vunpack.c.l.b16 %v128
    %v193 = vunpack.c.l.b16 %v129
    %v194 = vunpack.c.l.b16 %v130
    %v195 = vunpack.c.l.b16 %v131
    %v196 = vunpack.c.l.b16 %v132
    %v197 = vunpack.c.l.b16 %v133
    %v198 = vunpack.c.l.b16 %v134
    %v199 = vunpack.c.l.b16 %v135
    %v200 = vunpack.c.l.b16 %v136
    %v201 = vunpack.c.l.b16 %v137
    %v202 = vunpack.c.l.b16 %v138
    %v203 = vunpack.c.l.b16 %v139
    %v204 = vunpack.c.l.b16 %v140
    %v205 = vunpack.c.l.b16 %v141
    %v206 = vunpack.c.l.b16 %v142
    %v207 = vunpack.c.l.b16 %v143
    %v208 = vpack.c.b16 %v177, %v176
    %v209 = vpack.c.b16 %v179, %v178
    %v210 = vpack.c.b16 %v181, %v180
    %v211 = vpack.c.b16 %v183, %v182
    %v212 = vpack.c.b16 %v185, %v184
    %v213 = vpack.c.b16 %v187, %v186
    %v214 = vpack.c.b16 %v189, %v188
    %v215 = vpack.c.b16 %v191, %v190
    %v216 = vpack.c.b16 %v193, %v192
    %v217 = vpack.c.b16 %v195, %v194
    %v218 = vpack.c.b16 %v197, %v196
    %v219 = vpack.c.b16 %v199, %v198
    %v220 = vpack.c.b16 %v201, %v200
    %v221 = vpack.c.b16 %v203, %v202
    %v222 = vpack.c.b16 %v205, %v204
    %v223 = vpack.c.b16 %v207, %v206
    %240 = vmatprep.subr.bf16.mxu0 0
    %241 = vmatpush1.bf16.msra.mxu0 %v208
    %242 = vmatprep.subr.bf16.mxu0 0
    %243 = vmatpush1.bf16.msra.mxu0 %v209
    %244 = vmatprep.subr.bf16.mxu0 0
    %245 = vmatpush1.bf16.msra.mxu0 %v210
    %246 = vmatprep.subr.bf16.mxu0 0
    %247 = vmatpush1.bf16.msra.mxu0 %v211
    %248 = vmatprep.subr.bf16.mxu0 0
    %249 = vmatpush1.bf16.msra.mxu0 %v212
    %250 = vmatprep.subr.bf16.mxu0 0
    %251 = vmatpush1.bf16.msra.mxu0 %v213
    %252 = vmatprep.subr.bf16.mxu0 0
    %253 = vmatpush1.bf16.msra.mxu0 %v214
    %254 = vmatprep.subr.bf16.mxu0 0
    %255 = vmatpush1.bf16.msra.mxu0 %v215
    %256 = vmatprep.subr.bf16.mxu0 0
    %257 = vmatpush1.bf16.msra.mxu0 %v216
    %258 = vmatprep.subr.bf16.mxu0 0
    %259 = vmatpush1.bf16.msra.mxu0 %v217
    %260 = vmatprep.subr.bf16.mxu0 0
    %261 = vmatpush1.bf16.msra.mxu0 %v218
    %262 = vmatprep.subr.bf16.mxu0 0
    %263 = vmatpush1.bf16.msra.mxu0 %v219
    %264 = vmatprep.subr.bf16.mxu0 0
    %265 = vmatpush1.bf16.msra.mxu0 %v220
    %266 = vmatprep.subr.bf16.mxu0 0
    %267 = vmatpush1.bf16.msra.mxu0 %v221
    %268 = vmatprep.subr.bf16.mxu0 0
    %269 = vmatpush1.bf16.msra.mxu0 %v222
    %270 = vmatprep.subr.bf16.mxu0 0
    %271 = vmatpush1.bf16.msra.mxu0 %v223
    %272 = vmatprep.mubr.bf16.mxu0 %v111
    %273 = vmatmul.mubr.bf16.gmra.mrb[0].mxu0 %v110
    %v274 = vpop.f32.mrb[0].mxu0
    %v275 = vadd.f32 0.0, %v274
    %v276 = vpop.f32.mrb[0].mxu0
    %v277 = vpop.f32.mrb[0].mxu0
    %v278 = vpop.f32.mrb[0].mxu0
    %279 = vdwg.mxu0
    // Predicated region
    $region54: #{ctrnn_sequence.1} parent=1 // pred_check
      %p280 = pneg %p93
    $region55: #{ctrnn_sequence.1} parent=1 // pred_check_branch
      %282 = sbr.rel (%p280) target = $region57
    $region56: #{ctrnn_sequence.1} parent=1 // pred_region
      %s283 = sld [smem:[#allocation4]]
      %p284 = scmp.eq.s32.totalorder %s283, 0
      // Predicated region
      $region58: #{ctrnn_sequence.1} parent=56 // pred_check
        %p285 = pneg %p284
      $region59: #{ctrnn_sequence.1} parent=56 // pred_check_branch
        %287 = sbr.rel (%p285) target = $region61
      $region60: #{ctrnn_sequence.1} parent=56 // pred_region
        %v288 = vld [vmem:[%s5] sm:$0x1]
        %v290 = vlaneseq
        %v291 = vshrl.u32 %v290, 7
        %v292 = vsub.s32 0, %v291
        %v293 = vrot.slane %v288, %v292
        %v295 = vadd.f32 %v275, %v293
        %296 = vst [vmem:[#allocation14] sm:$0xff] %v295
      $region61: #{ctrnn_sequence.1} parent=56 // pred_fallthru
        _
      %s297 = sld [smem:[#allocation4]]
      %p298 = scmp.ne.s32.totalorder %s297, 0
      // Predicated region
      $region62: #{ctrnn_sequence.1} parent=56 // pred_check
        %p299 = pneg %p298
      $region63: #{ctrnn_sequence.1} parent=56 // pred_check_branch
        %301 = sbr.rel (%p299) target = $region65
      $region64: #{ctrnn_sequence.1} parent=56 // pred_region
        %v302 = vld [vmem:[%s1] sm:$0xff]
        %v303 = vmul.f32 %v302, 0.5
        %v304 = vld [vmem:[%s6] sm:$0x1]
        %v306 = vlaneseq
        %v307 = vshrl.u32 %v306, 7
        %v308 = vsub.s32 0, %v307
        %v309 = vrot.slane %v304, %v308
        %v311 = vadd.f32 %v275, %v309
        %v312 = vmul.f32 %v311, 0.5
        %v313 = vadd.f32 %v303, %v312
        %314 = vst [vmem:[#allocation14] sm:$0xff] %v313
      $region65: #{ctrnn_sequence.1} parent=56 // pred_fallthru
        _
    $region57: #{ctrnn_sequence.1} parent=1 // pred_fallthru
      _
    %p315 = scmp.gt.s32.totalorder 0, 0
    // Predicated region
    $region66: #{ctrnn_sequence.1} parent=1 // pred_check
      %p316 = pneg %p315
    $region67: #{ctrnn_sequence.1} parent=1 // pred_check_branch
      %318 = sbr.rel (%p316) target = $region69
    $region68: #{ctrnn_sequence.1} parent=1 // pred_region
      %v319 = vld [vmem:[#allocation14] sm:$0xff]
      %v320 = vmul.f32 %v319, 0.5
      %v321 = vld [vmem:[%s6] sm:$0x1]
      %v323 = vlaneseq
      %v324 = vshrl.u32 %v323, 7
      %v325 = vsub.s32 0, %v324
      %v326 = vrot.slane %v321, %v325
      %v328 = vadd.f32 %v275, %v326
      %v329 = vmul.f32 %v328, 0.5
      %v330 = vadd.f32 %v320, %v329
      %331 = vst [vmem:[#allocation14] sm:$0xff] %v330
    $region69: #{ctrnn_sequence.1} parent=1 // pred_fallthru
      _
    %v332 = vld [vmem:[#allocation14] sm:$0xff]
    %v333 = vtanh.pop %v332
    %334 = vst [vmem:[#allocation2 + $0x8] sm:$0xff] %v333
    %v335 = vpack.c.bf16 %v333, %v333
    %v336 = vld [vmem:[#allocation11] sm:$0xf]
    %v337 = vld [vmem:[#allocation11 + $0x4] sm:$0xf]
    %v338 = vld [vmem:[#allocation11 + $0x8] sm:$0xf]
    %v339 = vld [vmem:[#allocation11 + $0xc] sm:$0xf]
    %v340 = vld [vmem:[#allocation11 + $0x10] sm:$0xf]
    %v341 = vld [vmem:[#allocation11 + $0x14] sm:$0xf]
    %v342 = vld [vmem:[#allocation11 + $0x18] sm:$0xf]
    %v343 = vld [vmem:[#allocation11 + $0x1c] sm:$0xf]
    %v344 = vld [vmem:[#allocation11 + $0x20] sm:$0xf]
    %v345 = vld [vmem:[#allocation11 + $0x24] sm:$0xf]
    %v346 = vld [vmem:[#allocation11 + $0x28] sm:$0xf]
    %v347 = vld [vmem:[#allocation11 + $0x2c] sm:$0xf]
    %v348 = vld [vmem:[#allocation11 + $0x30] sm:$0xf]
    %v349 = vld [vmem:[#allocation11 + $0x34] sm:$0xf]
    %v350 = vld [vmem:[#allocation11 + $0x38] sm:$0xf]
    %v351 = vld [vmem:[#allocation11 + $0x3c] sm:$0xf]
    %v352 = vld [vmem:[%s8] sm:$0x1]
    %v354 = vlaneseq
    %v355 = vshrl.u32 %v354, 7
    %v356 = vsub.s32 0, %v355
    %v357 = vrot.slane %v352, %v356
    %v375 = vunpack.c.l.b16 %v336
    %v376 = vunpack.c.l.b16 %v337
    %v377 = vunpack.c.l.b16 %v338
    %v378 = vunpack.c.l.b16 %v339
    %v379 = vunpack.c.l.b16 %v340
    %v380 = vunpack.c.l.b16 %v341
    %v381 = vunpack.c.l.b16 %v342
    %v382 = vunpack.c.l.b16 %v343
    %v383 = vunpack.c.l.b16 %v344
    %v384 = vunpack.c.l.b16 %v345
    %v385 = vunpack.c.l.b16 %v346
    %v386 = vunpack.c.l.b16 %v347
    %v387 = vunpack.c.l.b16 %v348
    %v388 = vunpack.c.l.b16 %v349
    %v389 = vunpack.c.l.b16 %v350
    %v390 = vunpack.c.l.b16 %v351
    %v391 = vpack.c.b16 %v376, %v375
    %v392 = vpack.c.b16 %v378, %v377
    %v393 = vpack.c.b16 %v380, %v379
    %v394 = vpack.c.b16 %v382, %v381
    %v395 = vpack.c.b16 %v384, %v383
    %v396 = vpack.c.b16 %v386, %v385
    %v397 = vpack.c.b16 %v388, %v387
    %v398 = vpack.c.b16 %v390, %v389
    %407 = vmatprep.subr.bf16.mxu0 0
    %408 = vmatpush1.bf16.msra.mxu0 %v391
    %409 = vmatprep.subr.bf16.mxu0 0
    %410 = vmatpush1.bf16.msra.mxu0 %v392
    %411 = vmatprep.subr.bf16.mxu0 0
    %412 = vmatpush1.bf16.msra.mxu0 %v393
    %413 = vmatprep.subr.bf16.mxu0 0
    %414 = vmatpush1.bf16.msra.mxu0 %v394
    %415 = vmatprep.subr.bf16.mxu0 0
    %416 = vmatpush1.bf16.msra.mxu0 %v395
    %417 = vmatprep.subr.bf16.mxu0 0
    %418 = vmatpush1.bf16.msra.mxu0 %v396
    %419 = vmatprep.subr.bf16.mxu0 0
    %420 = vmatpush1.bf16.msra.mxu0 %v397
    %421 = vmatprep.subr.bf16.mxu0 0
    %422 = vmatpush1.bf16.msra.mxu0 %v398
    %423 = vmatprep.subr.bf16.mxu0 0
    %424 = vmatpush1.bf16.msra.mxu0 0
    %425 = vmatprep.subr.bf16.mxu0 0
    %426 = vmatpush1.bf16.msra.mxu0 0
    %427 = vmatprep.subr.bf16.mxu0 0
    %428 = vmatpush1.bf16.msra.mxu0 0
    %429 = vmatprep.subr.bf16.mxu0 0
    %430 = vmatpush1.bf16.msra.mxu0 0
    %431 = vmatprep.subr.bf16.mxu0 0
    %432 = vmatpush1.bf16.msra.mxu0 0
    %433 = vmatprep.subr.bf16.mxu0 0
    %434 = vmatpush1.bf16.msra.mxu0 0
    %435 = vmatprep.subr.bf16.mxu0 0
    %436 = vmatpush1.bf16.msra.mxu0 0
    %437 = vmatprep.subr.bf16.mxu0 0
    %438 = vmatpush1.bf16.msra.mxu0 0
    %439 = vmatprep.mubr.bf16.mxu0 0
    %440 = vmatmul.mubr.bf16.gmra.mrb[0].mxu0 %v335
    %v441 = vpop.f32.mrb[0].mxu0
    %v442 = vadd.f32 %v357, %v441
    %v443 = vpop.f32.mrb[0].mxu0
    %v444 = vpop.f32.mrb[0].mxu0
    %v445 = vpop.f32.mrb[0].mxu0
    %446 = vdwg.mxu0
    %v447 = vtanh.pop %v442
    %448 = vst [vmem:[#allocation13] sm:$0xff] %v447
    %v449 = vld [vmem:[#allocation8] sm:$0xff]
    %v450 = vsub.f32 %v447, %v449
    %v451 = vmul.f32 %v450, %v450
    %452 = vadd.xlane.f32.xlu0 %v451
    %v453 = vpop.xlane.xlu0 %452
    %vm454 = vcmask 7168
    %455 = vst.msk [vmem:[#allocation16] sm:$0xff] %vm454, %v453
    %s456 = scalar_lea.vmem [#allocation5], 8
    %v457 = vld [vmem:[%s456] sm:$0xff]
    %458 = vst [vmem:[#allocation2] sm:$0xff] %v457
    %v459 = vld [vmem:[#allocation2] sm:$0xff]
    %v460 = vld [vmem:[#allocation2 + $0x8] sm:$0xff]
    %v461 = vpack.c.bf16 %v459, %v459
    %v462 = vpack.c.bf16 %v460, %v460
    %v463 = vld [vmem:[#allocation10] sm:$0xf]
    %v464 = vld [vmem:[#allocation10 + $0x4] sm:$0xf]
    %v465 = vld [vmem:[#allocation10 + $0x8] sm:$0xf]
    %v466 = vld [vmem:[#allocation10 + $0xc] sm:$0xf]
    %v467 = vld [vmem:[#allocation10 + $0x10] sm:$0xf]
    %v468 = vld [vmem:[#allocation10 + $0x14] sm:$0xf]
    %v469 = vld [vmem:[#allocation10 + $0x18] sm:$0xf]
    %v470 = vld [vmem:[#allocation10 + $0x1c] sm:$0xf]
    %v471 = vld [vmem:[#allocation10 + $0x20] sm:$0xf]
    %v472 = vld [vmem:[#allocation10 + $0x24] sm:$0xf]
    %v473 = vld [vmem:[#allocation10 + $0x28] sm:$0xf]
    %v474 = vld [vmem:[#allocation10 + $0x2c] sm:$0xf]
    %v475 = vld [vmem:[#allocation10 + $0x30] sm:$0xf]
    %v476 = vld [vmem:[#allocation10 + $0x34] sm:$0xf]
    %v477 = vld [vmem:[#allocation10 + $0x38] sm:$0xf]
    %v478 = vld [vmem:[#allocation10 + $0x3c] sm:$0xf]
    %v479 = vld [vmem:[#allocation10 + $0x40] sm:$0xf]
    %v480 = vld [vmem:[#allocation10 + $0x44] sm:$0xf]
    %v481 = vld [vmem:[#allocation10 + $0x48] sm:$0xf]
    %v482 = vld [vmem:[#allocation10 + $0x4c] sm:$0xf]
    %v483 = vld [vmem:[#allocation10 + $0x50] sm:$0xf]
    %v484 = vld [vmem:[#allocation10 + $0x54] sm:$0xf]
    %v485 = vld [vmem:[#allocation10 + $0x58] sm:$0xf]
    %v486 = vld [vmem:[#allocation10 + $0x5c] sm:$0xf]
    %v487 = vld [vmem:[#allocation10 + $0x60] sm:$0xf]
    %v488 = vld [vmem:[#allocation10 + $0x64] sm:$0xf]
    %v489 = vld [vmem:[#allocation10 + $0x68] sm:$0xf]
    %v490 = vld [vmem:[#allocation10 + $0x6c] sm:$0xf]
    %v491 = vld [vmem:[#allocation10 + $0x70] sm:$0xf]
    %v492 = vld [vmem:[#allocation10 + $0x74] sm:$0xf]
    %v493 = vld [vmem:[#allocation10 + $0x78] sm:$0xf]
    %v494 = vld [vmem:[#allocation10 + $0x7c] sm:$0xf]
    %v495 = vld [vmem:[#allocation14] sm:$0xff]
    %v496 = vmul.f32 %v495, 0.5
    %v497 = vld [vmem:[%s6] sm:$0x1]
    %v499 = vlaneseq
    %v500 = vshrl.u32 %v499, 7
    %v501 = vsub.s32 0, %v500
    %v502 = vrot.slane %v497, %v501
    %v536 = vunpack.c.l.b16 %v463
    %v537 = vunpack.c.l.b16 %v464
    %v538 = vunpack.c.l.b16 %v465
    %v539 = vunpack.c.l.b16 %v466
    %v540 = vunpack.c.l.b16 %v467
    %v541 = vunpack.c.l.b16 %v468
    %v542 = vunpack.c.l.b16 %v469
    %v543 = vunpack.c.l.b16 %v470
    %v544 = vunpack.c.l.b16 %v471
    %v545 = vunpack.c.l.b16 %v472
    %v546 = vunpack.c.l.b16 %v473
    %v547 = vunpack.c.l.b16 %v474
    %v548 = vunpack.c.l.b16 %v475
    %v549 = vunpack.c.l.b16 %v476
    %v550 = vunpack.c.l.b16 %v477
    %v551 = vunpack.c.l.b16 %v478
    %v552 = vunpack.c.l.b16 %v479
    %v553 = vunpack.c.l.b16 %v480
    %v554 = vunpack.c.l.b16 %v481
    %v555 = vunpack.c.l.b16 %v482
    %v556 = vunpack.c.l.b16 %v483
    %v557 = vunpack.c.l.b16 %v484
    %v558 = vunpack.c.l.b16 %v485
    %v559 = vunpack.c.l.b16 %v486
    %v560 = vunpack.c.l.b16 %v487
    %v561 = vunpack.c.l.b16 %v488
    %v562 = vunpack.c.l.b16 %v489
    %v563 = vunpack.c.l.b16 %v490
    %v564 = vunpack.c.l.b16 %v491
    %v565 = vunpack.c.l.b16 %v492
    %v566 = vunpack.c.l.b16 %v493
    %v567 = vunpack.c.l.b16 %v494
    %v568 = vpack.c.b16 %v537, %v536
    %v569 = vpack.c.b16 %v539, %v538
    %v570 = vpack.c.b16 %v541, %v540
    %v571 = vpack.c.b16 %v543, %v542
    %v572 = vpack.c.b16 %v545, %v544
    %v573 = vpack.c.b16 %v547, %v546
    %v574 = vpack.c.b16 %v549, %v548
    %v575 = vpack.c.b16 %v551, %v550
    %v576 = vpack.c.b16 %v553, %v552
    %v577 = vpack.c.b16 %v555, %v554
    %v578 = vpack.c.b16 %v557, %v556
    %v579 = vpack.c.b16 %v559, %v558
    %v580 = vpack.c.b16 %v561, %v560
    %v581 = vpack.c.b16 %v563, %v562
    %v582 = vpack.c.b16 %v565, %v564
    %v583 = vpack.c.b16 %v567, %v566
    %600 = vmatprep.subr.bf16.mxu0 0
    %601 = vmatpush1.bf16.msra.mxu0 %v568
    %602 = vmatprep.subr.bf16.mxu0 0
    %603 = vmatpush1.bf16.msra.mxu0 %v569
    %604 = vmatprep.subr.bf16.mxu0 0
    %605 = vmatpush1.bf16.msra.mxu0 %v570
    %606 = vmatprep.subr.bf16.mxu0 0
    %607 = vmatpush1.bf16.msra.mxu0 %v571
    %608 = vmatprep.subr.bf16.mxu0 0
    %609 = vmatpush1.bf16.msra.mxu0 %v572
    %610 = vmatprep.subr.bf16.mxu0 0
    %611 = vmatpush1.bf16.msra.mxu0 %v573
    %612 = vmatprep.subr.bf16.mxu0 0
    %613 = vmatpush1.bf16.msra.mxu0 %v574
    %614 = vmatprep.subr.bf16.mxu0 0
    %615 = vmatpush1.bf16.msra.mxu0 %v575
    %616 = vmatprep.subr.bf16.mxu0 0
    %617 = vmatpush1.bf16.msra.mxu0 %v576
    %618 = vmatprep.subr.bf16.mxu0 0
    %619 = vmatpush1.bf16.msra.mxu0 %v577
    %620 = vmatprep.subr.bf16.mxu0 0
    %621 = vmatpush1.bf16.msra.mxu0 %v578
    %622 = vmatprep.subr.bf16.mxu0 0
    %623 = vmatpush1.bf16.msra.mxu0 %v579
    %624 = vmatprep.subr.bf16.mxu0 0
    %625 = vmatpush1.bf16.msra.mxu0 %v580
    %626 = vmatprep.subr.bf16.mxu0 0
    %627 = vmatpush1.bf16.msra.mxu0 %v581
    %628 = vmatprep.subr.bf16.mxu0 0
    %629 = vmatpush1.bf16.msra.mxu0 %v582
    %630 = vmatprep.subr.bf16.mxu0 0
    %631 = vmatpush1.bf16.msra.mxu0 %v583
    %632 = vmatprep.mubr.bf16.mxu0 %v462
    %633 = vmatmul.mubr.bf16.gmra.mrb[0].mxu0 %v461
    %v634 = vpop.f32.mrb[0].mxu0
    %v635 = vadd.f32 %v502, %v634
    %v636 = vpop.f32.mrb[0].mxu0
    %v637 = vpop.f32.mrb[0].mxu0
    %v638 = vpop.f32.mrb[0].mxu0
    %639 = vdwg.mxu0
    %v640 = vmul.f32 %v635, 0.5
    %v641 = vadd.f32 %v496, %v640
    %642 = vst [vmem:[#allocation14] sm:$0xff] %v641
    %v643 = vld [vmem:[#allocation14] sm:$0xff]
    %v644 = vtanh.pop %v643
    %645 = vst [vmem:[#allocation2 + $0x8] sm:$0xff] %v644
    %v646 = vpack.c.bf16 %v644, %v644
    %v647 = vld [vmem:[#allocation11] sm:$0xf]
    %v648 = vld [vmem:[#allocation11 + $0x4] sm:$0xf]
    %v649 = vld [vmem:[#allocation11 + $0x8] sm:$0xf]
    %v650 = vld [vmem:[#allocation11 + $0xc] sm:$0xf]
    %v651 = vld [vmem:[#allocation11 + $0x10] sm:$0xf]
    %v652 = vld [vmem:[#allocation11 + $0x14] sm:$0xf]
    %v653 = vld [vmem:[#allocation11 + $0x18] sm:$0xf]
    %v654 = vld [vmem:[#allocation11 + $0x1c] sm:$0xf]
    %v655 = vld [vmem:[#allocation11 + $0x20] sm:$0xf]
    %v656 = vld [vmem:[#allocation11 + $0x24] sm:$0xf]
    %v657 = vld [vmem:[#allocation11 + $0x28] sm:$0xf]
    %v658 = vld [vmem:[#allocation11 + $0x2c] sm:$0xf]
    %v659 = vld [vmem:[#allocation11 + $0x30] sm:$0xf]
    %v660 = vld [vmem:[#allocation11 + $0x34] sm:$0xf]
    %v661 = vld [vmem:[#allocation11 + $0x38] sm:$0xf]
    %v662 = vld [vmem:[#allocation11 + $0x3c] sm:$0xf]
    %v663 = vld [vmem:[%s8] sm:$0x1]
    %v665 = vlaneseq
    %v666 = vshrl.u32 %v665, 7
    %v667 = vsub.s32 0, %v666
    %v668 = vrot.slane %v663, %v667
    %v686 = vunpack.c.l.b16 %v647
    %v687 = vunpack.c.l.b16 %v648
    %v688 = vunpack.c.l.b16 %v649
    %v689 = vunpack.c.l.b16 %v650
    %v690 = vunpack.c.l.b16 %v651
    %v691 = vunpack.c.l.b16 %v652
    %v692 = vunpack.c.l.b16 %v653
    %v693 = vunpack.c.l.b16 %v654
    %v694 = vunpack.c.l.b16 %v655
    %v695 = vunpack.c.l.b16 %v656
    %v696 = vunpack.c.l.b16 %v657
    %v697 = vunpack.c.l.b16 %v658
    %v698 = vunpack.c.l.b16 %v659
    %v699 = vunpack.c.l.b16 %v660
    %v700 = vunpack.c.l.b16 %v661
    %v701 = vunpack.c.l.b16 %v662
    %v702 = vpack.c.b16 %v687, %v686
    %v703 = vpack.c.b16 %v689, %v688
    %v704 = vpack.c.b16 %v691, %v690
    %v705 = vpack.c.b16 %v693, %v692
    %v706 = vpack.c.b16 %v695, %v694
    %v707 = vpack.c.b16 %v697, %v696
    %v708 = vpack.c.b16 %v699, %v698
    %v709 = vpack.c.b16 %v701, %v700
    %718 = vmatprep.subr.bf16.mxu0 0
    %719 = vmatpush1.bf16.msra.mxu0 %v702
    %720 = vmatprep.subr.bf16.mxu0 0
    %721 = vmatpush1.bf16.msra.mxu0 %v703
    %722 = vmatprep.subr.bf16.mxu0 0
    %723 = vmatpush1.bf16.msra.mxu0 %v704
    %724 = vmatprep.subr.bf16.mxu0 0
    %725 = vmatpush1.bf16.msra.mxu0 %v705
    %726 = vmatprep.subr.bf16.mxu0 0
    %727 = vmatpush1.bf16.msra.mxu0 %v706
    %728 = vmatprep.subr.bf16.mxu0 0
    %729 = vmatpush1.bf16.msra.mxu0 %v707
    %730 = vmatprep.subr.bf16.mxu0 0
    %731 = vmatpush1.bf16.msra.mxu0 %v708
    %732 = vmatprep.subr.bf16.mxu0 0
    %733 = vmatpush1.bf16.msra.mxu0 %v709
    %734 = vmatprep.subr.bf16.mxu0 0
    %735 = vmatpush1.bf16.msra.mxu0 0
    %736 = vmatprep.subr.bf16.mxu0 0
    %737 = vmatpush1.bf16.msra.mxu0 0
    %738 = vmatprep.subr.bf16.mxu0 0
    %739 = vmatpush1.bf16.msra.mxu0 0
    %740 = vmatprep.subr.bf16.mxu0 0
    %741 = vmatpush1.bf16.msra.mxu0 0
    %742 = vmatprep.subr.bf16.mxu0 0
    %743 = vmatpush1.bf16.msra.mxu0 0
    %744 = vmatprep.subr.bf16.mxu0 0
    %745 = vmatpush1.bf16.msra.mxu0 0
    %746 = vmatprep.subr.bf16.mxu0 0
    %747 = vmatpush1.bf16.msra.mxu0 0
    %748 = vmatprep.subr.bf16.mxu0 0
    %749 = vmatpush1.bf16.msra.mxu0 0
    %750 = vmatprep.mubr.bf16.mxu0 0
    %751 = vmatmul.mubr.bf16.gmra.mrb[0].mxu0 %v646
    %v752 = vpop.f32.mrb[0].mxu0
    %v753 = vadd.f32 %v668, %v752
    %v754 = vpop.f32.mrb[0].mxu0
    %v755 = vpop.f32.mrb[0].mxu0
    %v756 = vpop.f32.mrb[0].mxu0
    %757 = vdwg.mxu0
    %v758 = vtanh.pop %v753
    %s759 = scalar_lea.vmem [#allocation13], 8
    %760 = vst [vmem:[%s759] sm:$0xff] %v758
    %s761 = scalar_lea.vmem [#allocation8], 8
    %v762 = vld [vmem:[%s761] sm:$0xff]
    %v763 = vsub.f32 %v758, %v762
    %v764 = vmul.f32 %v763, %v763
    %765 = vadd.xlane.f32.xlu0 %v764
    %v766 = vpop.xlane.xlu0 %765
    %vm767 = vcmask 15368
    %768 = vst.msk [vmem:[#allocation16] sm:$0xff] %vm767, %v766
    %s769 = scalar_lea.vmem [#allocation5], 16
    %v770 = vld [vmem:[%s769] sm:$0xff]
    %771 = vst [vmem:[#allocation2] sm:$0xff] %v770
    %v772 = vld [vmem:[#allocation2] sm:$0xff]
    %v773 = vld [vmem:[#allocation2 + $0x8] sm:$0xff]
    %v774 = vpack.c.bf16 %v772, %v772
    %v775 = vpack.c.bf16 %v773, %v773
    %v776 = vld [vmem:[#allocation10] sm:$0xf]
    %v777 = vld [vmem:[#allocation10 + $0x4] sm:$0xf]
    %v778 = vld [vmem:[#allocation10 + $0x8] sm:$0xf]
    %v779 = vld [vmem:[#allocation10 + $0xc] sm:$0xf]
    %v780 = vld [vmem:[#allocation10 + $0x10] sm:$0xf]
    %v781 = vld [vmem:[#allocation10 + $0x14] sm:$0xf]
    %v782 = vld [vmem:[#allocation10 + $0x18] sm:$0xf]
    %v783 = vld [vmem:[#allocation10 + $0x1c] sm:$0xf]
    %v784 = vld [vmem:[#allocation10 + $0x20] sm:$0xf]
    %v785 = vld [vmem:[#allocation10 + $0x24] sm:$0xf]
    %v786 = vld [vmem:[#allocation10 + $0x28] sm:$0xf]
    %v787 = vld [vmem:[#allocation10 + $0x2c] sm:$0xf]
    %v788 = vld [vmem:[#allocation10 + $0x30] sm:$0xf]
    %v789 = vld [vmem:[#allocation10 + $0x34] sm:$0xf]
    %v790 = vld [vmem:[#allocation10 + $0x38] sm:$0xf]
    %v791 = vld [vmem:[#allocation10 + $0x3c] sm:$0xf]
    %v792 = vld [vmem:[#allocation10 + $0x40] sm:$0xf]
    %v793 = vld [vmem:[#allocation10 + $0x44] sm:$0xf]
    %v794 = vld [vmem:[#allocation10 + $0x48] sm:$0xf]
    %v795 = vld [vmem:[#allocation10 + $0x4c] sm:$0xf]
    %v796 = vld [vmem:[#allocation10 + $0x50] sm:$0xf]
    %v797 = vld [vmem:[#allocation10 + $0x54] sm:$0xf]
    %v798 = vld [vmem:[#allocation10 + $0x58] sm:$0xf]
    %v799 = vld [vmem:[#allocation10 + $0x5c] sm:$0xf]
    %v800 = vld [vmem:[#allocation10 + $0x60] sm:$0xf]
    %v801 = vld [vmem:[#allocation10 + $0x64] sm:$0xf]
    %v802 = vld [vmem:[#allocation10 + $0x68] sm:$0xf]
    %v803 = vld [vmem:[#allocation10 + $0x6c] sm:$0xf]
    %v804 = vld [vmem:[#allocation10 + $0x70] sm:$0xf]
    %v805 = vld [vmem:[#allocation10 + $0x74] sm:$0xf]
    %v806 = vld [vmem:[#allocation10 + $0x78] sm:$0xf]
    %v807 = vld [vmem:[#allocation10 + $0x7c] sm:$0xf]
    %v808 = vld [vmem:[#allocation14] sm:$0xff]
    %v809 = vmul.f32 %v808, 0.5
    %v810 = vld [vmem:[%s6] sm:$0x1]
    %v812 = vlaneseq
    %v813 = vshrl.u32 %v812, 7
    %v814 = vsub.s32 0, %v813
    %v815 = vrot.slane %v810, %v814
    %v849 = vunpack.c.l.b16 %v776
    %v850 = vunpack.c.l.b16 %v777
    %v851 = vunpack.c.l.b16 %v778
    %v852 = vunpack.c.l.b16 %v779
    %v853 = vunpack.c.l.b16 %v780
    %v854 = vunpack.c.l.b16 %v781
    %v855 = vunpack.c.l.b16 %v782
    %v856 = vunpack.c.l.b16 %v783
    %v857 = vunpack.c.l.b16 %v784
    %v858 = vunpack.c.l.b16 %v785
    %v859 = vunpack.c.l.b16 %v786
    %v860 = vunpack.c.l.b16 %v787
    %v861 = vunpack.c.l.b16 %v788
    %v862 = vunpack.c.l.b16 %v789
    %v863 = vunpack.c.l.b16 %v790
    %v864 = vunpack.c.l.b16 %v791
    %v865 = vunpack.c.l.b16 %v792
    %v866 = vunpack.c.l.b16 %v793
    %v867 = vunpack.c.l.b16 %v794
    %v868 = vunpack.c.l.b16 %v795
    %v869 = vunpack.c.l.b16 %v796
    %v870 = vunpack.c.l.b16 %v797
    %v871 = vunpack.c.l.b16 %v798
    %v872 = vunpack.c.l.b16 %v799
    %v873 = vunpack.c.l.b16 %v800
    %v874 = vunpack.c.l.b16 %v801
    %v875 = vunpack.c.l.b16 %v802
    %v876 = vunpack.c.l.b16 %v803
    %v877 = vunpack.c.l.b16 %v804
    %v878 = vunpack.c.l.b16 %v805
    %v879 = vunpack.c.l.b16 %v806
    %v880 = vunpack.c.l.b16 %v807
    %v881 = vpack.c.b16 %v850, %v849
    %v882 = vpack.c.b16 %v852, %v851
    %v883 = vpack.c.b16 %v854, %v853
    %v884 = vpack.c.b16 %v856, %v855
    %v885 = vpack.c.b16 %v858, %v857
    %v886 = vpack.c.b16 %v860, %v859
    %v887 = vpack.c.b16 %v862, %v861
    %v888 = vpack.c.b16 %v864, %v863
    %v889 = vpack.c.b16 %v866, %v865
    %v890 = vpack.c.b16 %v868, %v867
    %v891 = vpack.c.b16 %v870, %v869
    %v892 = vpack.c.b16 %v872, %v871
    %v893 = vpack.c.b16 %v874, %v873
    %v894 = vpack.c.b16 %v876, %v875
    %v895 = vpack.c.b16 %v878, %v877
    %v896 = vpack.c.b16 %v880, %v879
    %913 = vmatprep.subr.bf16.mxu0 0
    %914 = vmatpush1.bf16.msra.mxu0 %v881
    %915 = vmatprep.subr.bf16.mxu0 0
    %916 = vmatpush1.bf16.msra.mxu0 %v882
    %917 = vmatprep.subr.bf16.mxu0 0
    %918 = vmatpush1.bf16.msra.mxu0 %v883
    %919 = vmatprep.subr.bf16.mxu0 0
    %920 = vmatpush1.bf16.msra.mxu0 %v884
    %921 = vmatprep.subr.bf16.mxu0 0
    %922 = vmatpush1.bf16.msra.mxu0 %v885
    %923 = vmatprep.subr.bf16.mxu0 0
    %924 = vmatpush1.bf16.msra.mxu0 %v886
    %925 = vmatprep.subr.bf16.mxu0 0
    %926 = vmatpush1.bf16.msra.mxu0 %v887
    %927 = vmatprep.subr.bf16.mxu0 0
    %928 = vmatpush1.bf16.msra.mxu0 %v888
    %929 = vmatprep.subr.bf16.mxu0 0
    %930 = vmatpush1.bf16.msra.mxu0 %v889
    %931 = vmatprep.subr.bf16.mxu0 0
    %932 = vmatpush1.bf16.msra.mxu0 %v890
    %933 = vmatprep.subr.bf16.mxu0 0
    %934 = vmatpush1.bf16.msra.mxu0 %v891
    %935 = vmatprep.subr.bf16.mxu0 0
    %936 = vmatpush1.bf16.msra.mxu0 %v892
    %937 = vmatprep.subr.bf16.mxu0 0
    %938 = vmatpush1.bf16.msra.mxu0 %v893
    %939 = vmatprep.subr.bf16.mxu0 0
    %940 = vmatpush1.bf16.msra.mxu0 %v894
    %941 = vmatprep.subr.bf16.mxu0 0
    %942 = vmatpush1.bf16.msra.mxu0 %v895
    %943 = vmatprep.subr.bf16.mxu0 0
    %944 = vmatpush1.bf16.msra.mxu0 %v896
    %945 = vmatprep.mubr.bf16.mxu0 %v775
    %946 = vmatmul.mubr.bf16.gmra.mrb[0].mxu0 %v774
    %v947 = vpop.f32.mrb[0].mxu0
    %v948 = vadd.f32 %v815, %v947
    %v949 = vpop.f32.mrb[0].mxu0
    %v950 = vpop.f32.mrb[0].mxu0
    %v951 = vpop.f32.mrb[0].mxu0
    %952 = vdwg.mxu0
    %v953 = vmul.f32 %v948, 0.5
    %v954 = vadd.f32 %v809, %v953
    %955 = vst [vmem:[#allocation14] sm:$0xff] %v954
    %v956 = vld [vmem:[#allocation14] sm:$0xff]
    %v957 = vtanh.pop %v956
    %958 = vst [vmem:[#allocation2 + $0x8] sm:$0xff] %v957
    %v959 = vpack.c.bf16 %v957, %v957
    %v960 = vld [vmem:[#allocation11] sm:$0xf]
    %v961 = vld [vmem:[#allocation11 + $0x4] sm:$0xf]
    %v962 = vld [vmem:[#allocation11 + $0x8] sm:$0xf]
    %v963 = vld [vmem:[#allocation11 + $0xc] sm:$0xf]
    %v964 = vld [vmem:[#allocation11 + $0x10] sm:$0xf]
    %v965 = vld [vmem:[#allocation11 + $0x14] sm:$0xf]
    %v966 = vld [vmem:[#allocation11 + $0x18] sm:$0xf]
    %v967 = vld [vmem:[#allocation11 + $0x1c] sm:$0xf]
    %v968 = vld [vmem:[#allocation11 + $0x20] sm:$0xf]
    %v969 = vld [vmem:[#allocation11 + $0x24] sm:$0xf]
    %v970 = vld [vmem:[#allocation11 + $0x28] sm:$0xf]
    %v971 = vld [vmem:[#allocation11 + $0x2c] sm:$0xf]
    %v972 = vld [vmem:[#allocation11 + $0x30] sm:$0xf]
    %v973 = vld [vmem:[#allocation11 + $0x34] sm:$0xf]
    %v974 = vld [vmem:[#allocation11 + $0x38] sm:$0xf]
    %v975 = vld [vmem:[#allocation11 + $0x3c] sm:$0xf]
    %v976 = vld [vmem:[%s8] sm:$0x1]
    %v978 = vlaneseq
    %v979 = vshrl.u32 %v978, 7
    %v980 = vsub.s32 0, %v979
    %v981 = vrot.slane %v976, %v980
    %v999 = vunpack.c.l.b16 %v960
    %v1000 = vunpack.c.l.b16 %v961
    %v1001 = vunpack.c.l.b16 %v962
    %v1002 = vunpack.c.l.b16 %v963
    %v1003 = vunpack.c.l.b16 %v964
    %v1004 = vunpack.c.l.b16 %v965
    %v1005 = vunpack.c.l.b16 %v966
    %v1006 = vunpack.c.l.b16 %v967
    %v1007 = vunpack.c.l.b16 %v968
    %v1008 = vunpack.c.l.b16 %v969
    %v1009 = vunpack.c.l.b16 %v970
    %v1010 = vunpack.c.l.b16 %v971
    %v1011 = vunpack.c.l.b16 %v972
    %v1012 = vunpack.c.l.b16 %v973
    %v1013 = vunpack.c.l.b16 %v974
    %v1014 = vunpack.c.l.b16 %v975
    %v1015 = vpack.c.b16 %v1000, %v999
    %v1016 = vpack.c.b16 %v1002, %v1001
    %v1017 = vpack.c.b16 %v1004, %v1003
    %v1018 = vpack.c.b16 %v1006, %v1005
    %v1019 = vpack.c.b16 %v1008, %v1007
    %v1020 = vpack.c.b16 %v1010, %v1009
    %v1021 = vpack.c.b16 %v1012, %v1011
    %v1022 = vpack.c.b16 %v1014, %v1013
    %1031 = vmatprep.subr.bf16.mxu0 0
    %1032 = vmatpush1.bf16.msra.mxu0 %v1015
    %1033 = vmatprep.subr.bf16.mxu0 0
    %1034 = vmatpush1.bf16.msra.mxu0 %v1016
    %1035 = vmatprep.subr.bf16.mxu0 0
    %1036 = vmatpush1.bf16.msra.mxu0 %v1017
    %1037 = vmatprep.subr.bf16.mxu0 0
    %1038 = vmatpush1.bf16.msra.mxu0 %v1018
    %1039 = vmatprep.subr.bf16.mxu0 0
    %1040 = vmatpush1.bf16.msra.mxu0 %v1019
    %1041 = vmatprep.subr.bf16.mxu0 0
    %1042 = vmatpush1.bf16.msra.mxu0 %v1020
    %1043 = vmatprep.subr.bf16.mxu0 0
    %1044 = vmatpush1.bf16.msra.mxu0 %v1021
    %1045 = vmatprep.subr.bf16.mxu0 0
    %1046 = vmatpush1.bf16.msra.mxu0 %v1022
    %1047 = vmatprep.subr.bf16.mxu0 0
    %1048 = vmatpush1.bf16.msra.mxu0 0
    %1049 = vmatprep.subr.bf16.mxu0 0
    %1050 = vmatpush1.bf16.msra.mxu0 0
    %1051 = vmatprep.subr.bf16.mxu0 0
    %1052 = vmatpush1.bf16.msra.mxu0 0
    %1053 = vmatprep.subr.bf16.mxu0 0
    %1054 = vmatpush1.bf16.msra.mxu0 0
    %1055 = vmatprep.subr.bf16.mxu0 0
    %1056 = vmatpush1.bf16.msra.mxu0 0
    %1057 = vmatprep.subr.bf16.mxu0 0
    %1058 = vmatpush1.bf16.msra.mxu0 0
    %1059 = vmatprep.subr.bf16.mxu0 0
    %1060 = vmatpush1.bf16.msra.mxu0 0
    %1061 = vmatprep.subr.bf16.mxu0 0
    %1062 = vmatpush1.bf16.msra.mxu0 0
    %1063 = vmatprep.mubr.bf16.mxu0 0
    %1064 = vmatmul.mubr.bf16.gmra.mrb[0].mxu0 %v959
    %v1065 = vpop.f32.mrb[0].mxu0
    %v1066 = vadd.f32 %v981, %v1065
    %v1067 = vpop.f32.mrb[0].mxu0
    %v1068 = vpop.f32.mrb[0].mxu0
    %v1069 = vpop.f32.mrb[0].mxu0
    %1070 = vdwg.mxu0
    %v1071 = vtanh.pop %v1066
    %s1072 = scalar_lea.vmem [#allocation13], 16
    %1073 = vst [vmem:[%s1072] sm:$0xff] %v1071
    %s1074 = scalar_lea.vmem [#allocation8], 16
    %v1075 = vld [vmem:[%s1074] sm:$0xff]
    %v1076 = vsub.f32 %v1071, %v1075
    %v1077 = vmul.f32 %v1076, %v1076
    %1078 = vadd.xlane.f32.xlu0 %v1077
    %v1079 = vpop.xlane.xlu0 %1078
    %vm1080 = vcmask 23568
    %1081 = vst.msk [vmem:[#allocation16] sm:$0xff] %vm1080, %v1079
    %s1082 = scalar_lea.vmem [#allocation5], 24
    %v1083 = vld [vmem:[%s1082] sm:$0xff]
    %1084 = vst [vmem:[#allocation2] sm:$0xff] %v1083
    %v1085 = vld [vmem:[#allocation2] sm:$0xff]
    %v1086 = vld [vmem:[#allocation2 + $0x8] sm:$0xff]
    %v1087 = vpack.c.bf16 %v1085, %v1085
    %v1088 = vpack.c.bf16 %v1086, %v1086
    %v1089 = vld [vmem:[#allocation10] sm:$0xf]
    %v1090 = vld [vmem:[#allocation10 + $0x4] sm:$0xf]
    %v1091 = vld [vmem:[#allocation10 + $0x8] sm:$0xf]
    %v1092 = vld [vmem:[#allocation10 + $0xc] sm:$0xf]
    %v1093 = vld [vmem:[#allocation10 + $0x10] sm:$0xf]
    %v1094 = vld [vmem:[#allocation10 + $0x14] sm:$0xf]
    %v1095 = vld [vmem:[#allocation10 + $0x18] sm:$0xf]
    %v1096 = vld [vmem:[#allocation10 + $0x1c] sm:$0xf]
    %v1097 = vld [vmem:[#allocation10 + $0x20] sm:$0xf]
    %v1098 = vld [vmem:[#allocation10 + $0x24] sm:$0xf]
    %v1099 = vld [vmem:[#allocation10 + $0x28] sm:$0xf]
    %v1100 = vld [vmem:[#allocation10 + $0x2c] sm:$0xf]
    %v1101 = vld [vmem:[#allocation10 + $0x30] sm:$0xf]
    %v1102 = vld [vmem:[#allocation10 + $0x34] sm:$0xf]
    %v1103 = vld [vmem:[#allocation10 + $0x38] sm:$0xf]
    %v1104 = vld [vmem:[#allocation10 + $0x3c] sm:$0xf]
    %v1105 = vld [vmem:[#allocation10 + $0x40] sm:$0xf]
    %v1106 = vld [vmem:[#allocation10 + $0x44] sm:$0xf]
    %v1107 = vld [vmem:[#allocation10 + $0x48] sm:$0xf]
    %v1108 = vld [vmem:[#allocation10 + $0x4c] sm:$0xf]
    %v1109 = vld [vmem:[#allocation10 + $0x50] sm:$0xf]
    %v1110 = vld [vmem:[#allocation10 + $0x54] sm:$0xf]
    %v1111 = vld [vmem:[#allocation10 + $0x58] sm:$0xf]
    %v1112 = vld [vmem:[#allocation10 + $0x5c] sm:$0xf]
    %v1113 = vld [vmem:[#allocation10 + $0x60] sm:$0xf]
    %v1114 = vld [vmem:[#allocation10 + $0x64] sm:$0xf]
    %v1115 = vld [vmem:[#allocation10 + $0x68] sm:$0xf]
    %v1116 = vld [vmem:[#allocation10 + $0x6c] sm:$0xf]
    %v1117 = vld [vmem:[#allocation10 + $0x70] sm:$0xf]
    %v1118 = vld [vmem:[#allocation10 + $0x74] sm:$0xf]
    %v1119 = vld [vmem:[#allocation10 + $0x78] sm:$0xf]
    %v1120 = vld [vmem:[#allocation10 + $0x7c] sm:$0xf]
    %v1121 = vld [vmem:[#allocation14] sm:$0xff]
    %v1122 = vmul.f32 %v1121, 0.5
    %v1123 = vld [vmem:[%s6] sm:$0x1]
    %v1125 = vlaneseq
    %v1126 = vshrl.u32 %v1125, 7
    %v1127 = vsub.s32 0, %v1126
    %v1128 = vrot.slane %v1123, %v1127
    %v1162 = vunpack.c.l.b16 %v1089
    %v1163 = vunpack.c.l.b16 %v1090
    %v1164 = vunpack.c.l.b16 %v1091
    %v1165 = vunpack.c.l.b16 %v1092
    %v1166 = vunpack.c.l.b16 %v1093
    %v1167 = vunpack.c.l.b16 %v1094
    %v1168 = vunpack.c.l.b16 %v1095
    %v1169 = vunpack.c.l.b16 %v1096
    %v1170 = vunpack.c.l.b16 %v1097
    %v1171 = vunpack.c.l.b16 %v1098
    %v1172 = vunpack.c.l.b16 %v1099
    %v1173 = vunpack.c.l.b16 %v1100
    %v1174 = vunpack.c.l.b16 %v1101
    %v1175 = vunpack.c.l.b16 %v1102
    %v1176 = vunpack.c.l.b16 %v1103
    %v1177 = vunpack.c.l.b16 %v1104
    %v1178 = vunpack.c.l.b16 %v1105
    %v1179 = vunpack.c.l.b16 %v1106
    %v1180 = vunpack.c.l.b16 %v1107
    %v1181 = vunpack.c.l.b16 %v1108
    %v1182 = vunpack.c.l.b16 %v1109
    %v1183 = vunpack.c.l.b16 %v1110
    %v1184 = vunpack.c.l.b16 %v1111
    %v1185 = vunpack.c.l.b16 %v1112
    %v1186 = vunpack.c.l.b16 %v1113
    %v1187 = vunpack.c.l.b16 %v1114
    %v1188 = vunpack.c.l.b16 %v1115
    %v1189 = vunpack.c.l.b16 %v1116
    %v1190 = vunpack.c.l.b16 %v1117
    %v1191 = vunpack.c.l.b16 %v1118
    %v1192 = vunpack.c.l.b16 %v1119
    %v1193 = vunpack.c.l.b16 %v1120
    %v1194 = vpack.c.b16 %v1163, %v1162
    %v1195 = vpack.c.b16 %v1165, %v1164
    %v1196 = vpack.c.b16 %v1167, %v1166
    %v1197 = vpack.c.b16 %v1169, %v1168
    %v1198 = vpack.c.b16 %v1171, %v1170
    %v1199 = vpack.c.b16 %v1173, %v1172
    %v1200 = vpack.c.b16 %v1175, %v1174
    %v1201 = vpack.c.b16 %v1177, %v1176
    %v1202 = vpack.c.b16 %v1179, %v1178
    %v1203 = vpack.c.b16 %v1181, %v1180
    %v1204 = vpack.c.b16 %v1183, %v1182
    %v1205 = vpack.c.b16 %v1185, %v1184
    %v1206 = vpack.c.b16 %v1187, %v1186
    %v1207 = vpack.c.b16 %v1189, %v1188
    %v1208 = vpack.c.b16 %v1191, %v1190
    %v1209 = vpack.c.b16 %v1193, %v1192
    %1226 = vmatprep.subr.bf16.mxu0 0
    %1227 = vmatpush1.bf16.msra.mxu0 %v1194
    %1228 = vmatprep.subr.bf16.mxu0 0
    %1229 = vmatpush1.bf16.msra.mxu0 %v1195
    %1230 = vmatprep.subr.bf16.mxu0 0
    %1231 = vmatpush1.bf16.msra.mxu0 %v1196
    %1232 = vmatprep.subr.bf16.mxu0 0
    %1233 = vmatpush1.bf16.msra.mxu0 %v1197
    %1234 = vmatprep.subr.bf16.mxu0 0
    %1235 = vmatpush1.bf16.msra.mxu0 %v1198
    %1236 = vmatprep.subr.bf16.mxu0 0
    %1237 = vmatpush1.bf16.msra.mxu0 %v1199
    %1238 = vmatprep.subr.bf16.mxu0 0
    %1239 = vmatpush1.bf16.msra.mxu0 %v1200
    %1240 = vmatprep.subr.bf16.mxu0 0
    %1241 = vmatpush1.bf16.msra.mxu0 %v1201
    %1242 = vmatprep.subr.bf16.mxu0 0
    %1243 = vmatpush1.bf16.msra.mxu0 %v1202
    %1244 = vmatprep.subr.bf16.mxu0 0
    %1245 = vmatpush1.bf16.msra.mxu0 %v1203
    %1246 = vmatprep.subr.bf16.mxu0 0
    %1247 = vmatpush1.bf16.msra.mxu0 %v1204
    %1248 = vmatprep.subr.bf16.mxu0 0
    %1249 = vmatpush1.bf16.msra.mxu0 %v1205
    %1250 = vmatprep.subr.bf16.mxu0 0
    %1251 = vmatpush1.bf16.msra.mxu0 %v1206
    %1252 = vmatprep.subr.bf16.mxu0 0
    %1253 = vmatpush1.bf16.msra.mxu0 %v1207
    %1254 = vmatprep.subr.bf16.mxu0 0
    %1255 = vmatpush1.bf16.msra.mxu0 %v1208
    %1256 = vmatprep.subr.bf16.mxu0 0
    %1257 = vmatpush1.bf16.msra.mxu0 %v1209
    %1258 = vmatprep.mubr.bf16.mxu0 %v1088
    %1259 = vmatmul.mubr.bf16.gmra.mrb[0].mxu0 %v1087
    %v1260 = vpop.f32.mrb[0].mxu0
    %v1261 = vadd.f32 %v1128, %v1260
    %v1262 = vpop.f32.mrb[0].mxu0
    %v1263 = vpop.f32.mrb[0].mxu0
    %v1264 = vpop.f32.mrb[0].mxu0
    %1265 = vdwg.mxu0
    %v1266 = vmul.f32 %v1261, 0.5
    %v1267 = vadd.f32 %v1122, %v1266
    %1268 = vst [vmem:[#allocation14] sm:$0xff] %v1267
    %v1269 = vld [vmem:[#allocation14] sm:$0xff]
    %v1270 = vtanh.pop %v1269
    %1271 = vst [vmem:[#allocation2 + $0x8] sm:$0xff] %v1270
    %v1272 = vpack.c.bf16 %v1270, %v1270
    %v1273 = vld [vmem:[#allocation11] sm:$0xf]
    %v1274 = vld [vmem:[#allocation11 + $0x4] sm:$0xf]
    %v1275 = vld [vmem:[#allocation11 + $0x8] sm:$0xf]
    %v1276 = vld [vmem:[#allocation11 + $0xc] sm:$0xf]
    %v1277 = vld [vmem:[#allocation11 + $0x10] sm:$0xf]
    %v1278 = vld [vmem:[#allocation11 + $0x14] sm:$0xf]
    %v1279 = vld [vmem:[#allocation11 + $0x18] sm:$0xf]
    %v1280 = vld [vmem:[#allocation11 + $0x1c] sm:$0xf]
    %v1281 = vld [vmem:[#allocation11 + $0x20] sm:$0xf]
    %v1282 = vld [vmem:[#allocation11 + $0x24] sm:$0xf]
    %v1283 = vld [vmem:[#allocation11 + $0x28] sm:$0xf]
    %v1284 = vld [vmem:[#allocation11 + $0x2c] sm:$0xf]
    %v1285 = vld [vmem:[#allocation11 + $0x30] sm:$0xf]
    %v1286 = vld [vmem:[#allocation11 + $0x34] sm:$0xf]
    %v1287 = vld [vmem:[#allocation11 + $0x38] sm:$0xf]
    %v1288 = vld [vmem:[#allocation11 + $0x3c] sm:$0xf]
    %v1289 = vld [vmem:[%s8] sm:$0x1]
    %v1291 = vlaneseq
    %v1292 = vshrl.u32 %v1291, 7
    %v1293 = vsub.s32 0, %v1292
    %v1294 = vrot.slane %v1289, %v1293
    %v1312 = vunpack.c.l.b16 %v1273
    %v1313 = vunpack.c.l.b16 %v1274
    %v1314 = vunpack.c.l.b16 %v1275
    %v1315 = vunpack.c.l.b16 %v1276
    %v1316 = vunpack.c.l.b16 %v1277
    %v1317 = vunpack.c.l.b16 %v1278
    %v1318 = vunpack.c.l.b16 %v1279
    %v1319 = vunpack.c.l.b16 %v1280
    %v1320 = vunpack.c.l.b16 %v1281
    %v1321 = vunpack.c.l.b16 %v1282
    %v1322 = vunpack.c.l.b16 %v1283
    %v1323 = vunpack.c.l.b16 %v1284
    %v1324 = vunpack.c.l.b16 %v1285
    %v1325 = vunpack.c.l.b16 %v1286
    %v1326 = vunpack.c.l.b16 %v1287
    %v1327 = vunpack.c.l.b16 %v1288
    %v1328 = vpack.c.b16 %v1313, %v1312
    %v1329 = vpack.c.b16 %v1315, %v1314
    %v1330 = vpack.c.b16 %v1317, %v1316
    %v1331 = vpack.c.b16 %v1319, %v1318
    %v1332 = vpack.c.b16 %v1321, %v1320
    %v1333 = vpack.c.b16 %v1323, %v1322
    %v1334 = vpack.c.b16 %v1325, %v1324
    %v1335 = vpack.c.b16 %v1327, %v1326
    %1344 = vmatprep.subr.bf16.mxu0 0
    %1345 = vmatpush1.bf16.msra.mxu0 %v1328
    %1346 = vmatprep.subr.bf16.mxu0 0
    %1347 = vmatpush1.bf16.msra.mxu0 %v1329
    %1348 = vmatprep.subr.bf16.mxu0 0
    %1349 = vmatpush1.bf16.msra.mxu0 %v1330
    %1350 = vmatprep.subr.bf16.mxu0 0
    %1351 = vmatpush1.bf16.msra.mxu0 %v1331
    %1352 = vmatprep.subr.bf16.mxu0 0
    %1353 = vmatpush1.bf16.msra.mxu0 %v1332
    %1354 = vmatprep.subr.bf16.mxu0 0
    %1355 = vmatpush1.bf16.msra.mxu0 %v1333
    %1356 = vmatprep.subr.bf16.mxu0 0
    %1357 = vmatpush1.bf16.msra.mxu0 %v1334
    %1358 = vmatprep.subr.bf16.mxu0 0
    %1359 = vmatpush1.bf16.msra.mxu0 %v1335
    %1360 = vmatprep.subr.bf16.mxu0 0
    %1361 = vmatpush1.bf16.msra.mxu0 0
    %1362 = vmatprep.subr.bf16.mxu0 0
    %1363 = vmatpush1.bf16.msra.mxu0 0
    %1364 = vmatprep.subr.bf16.mxu0 0
    %1365 = vmatpush1.bf16.msra.mxu0 0
    %1366 = vmatprep.subr.bf16.mxu0 0
    %1367 = vmatpush1.bf16.msra.mxu0 0
    %1368 = vmatprep.subr.bf16.mxu0 0
    %1369 = vmatpush1.bf16.msra.mxu0 0
    %1370 = vmatprep.subr.bf16.mxu0 0
    %1371 = vmatpush1.bf16.msra.mxu0 0
    %1372 = vmatprep.subr.bf16.mxu0 0
    %1373 = vmatpush1.bf16.msra.mxu0 0
    %1374 = vmatprep.subr.bf16.mxu0 0
    %1375 = vmatpush1.bf16.msra.mxu0 0
    %1376 = vmatprep.mubr.bf16.mxu0 0
    %1377 = vmatmul.mubr.bf16.gmra.mrb[0].mxu0 %v1272
    %v1378 = vpop.f32.mrb[0].mxu0
    %v1379 = vadd.f32 %v1294, %v1378
    %v1380 = vpop.f32.mrb[0].mxu0
    %v1381 = vpop.f32.mrb[0].mxu0
    %v1382 = vpop.f32.mrb[0].mxu0
    %1383 = vdwg.mxu0
    %v1384 = vtanh.pop %v1379
    %s1385 = scalar_lea.vmem [#allocation13], 24
    %1386 = vst [vmem:[%s1385] sm:$0xff] %v1384
    %s1387 = scalar_lea.vmem [#allocation8], 24
    %v1388 = vld [vmem:[%s1387] sm:$0xff]
    %v1389 = vsub.f32 %v1384, %v1388
    %v1390 = vmul.f32 %v1389, %v1389
    %1391 = vadd.xlane.f32.xlu0 %v1390
    %v1392 = vpop.xlane.xlu0 %1391
    %vm1393 = vcmask 31768
    %1394 = vst.msk [vmem:[#allocation16] sm:$0xff] %vm1393, %v1392
    %s1395 = scalar_lea.vmem [#allocation5], 32
    %v1396 = vld [vmem:[%s1395] sm:$0xff]
    %1397 = vst [vmem:[#allocation2] sm:$0xff] %v1396
    %v1398 = vld [vmem:[#allocation2] sm:$0xff]
    %v1399 = vld [vmem:[#allocation2 + $0x8] sm:$0xff]
    %v1400 = vpack.c.bf16 %v1398, %v1398
    %v1401 = vpack.c.bf16 %v1399, %v1399
    %v1402 = vld [vmem:[#allocation10] sm:$0xf]
    %v1403 = vld [vmem:[#allocation10 + $0x4] sm:$0xf]
    %v1404 = vld [vmem:[#allocation10 + $0x8] sm:$0xf]
    %v1405 = vld [vmem:[#allocation10 + $0xc] sm:$0xf]
    %v1406 = vld [vmem:[#allocation10 + $0x10] sm:$0xf]
    %v1407 = vld [vmem:[#allocation10 + $0x14] sm:$0xf]
    %v1408 = vld [vmem:[#allocation10 + $0x18] sm:$0xf]
    %v1409 = vld [vmem:[#allocation10 + $0x1c] sm:$0xf]
    %v1410 = vld [vmem:[#allocation10 + $0x20] sm:$0xf]
    %v1411 = vld [vmem:[#allocation10 + $0x24] sm:$0xf]
    %v1412 = vld [vmem:[#allocation10 + $0x28] sm:$0xf]
    %v1413 = vld [vmem:[#allocation10 + $0x2c] sm:$0xf]
    %v1414 = vld [vmem:[#allocation10 + $0x30] sm:$0xf]
    %v1415 = vld [vmem:[#allocation10 + $0x34] sm:$0xf]
    %v1416 = vld [vmem:[#allocation10 + $0x38] sm:$0xf]
    %v1417 = vld [vmem:[#allocation10 + $0x3c] sm:$0xf]
    %v1418 = vld [vmem:[#allocation10 + $0x40] sm:$0xf]
    %v1419 = vld [vmem:[#allocation10 + $0x44] sm:$0xf]
    %v1420 = vld [vmem:[#allocation10 + $0x48] sm:$0xf]
    %v1421 = vld [vmem:[#allocation10 + $0x4c] sm:$0xf]
    %v1422 = vld [vmem:[#allocation10 + $0x50] sm:$0xf]
    %v1423 = vld [vmem:[#allocation10 + $0x54] sm:$0xf]
    %v1424 = vld [vmem:[#allocation10 + $0x58] sm:$0xf]
    %v1425 = vld [vmem:[#allocation10 + $0x5c] sm:$0xf]
    %v1426 = vld [vmem:[#allocation10 + $0x60] sm:$0xf]
    %v1427 = vld [vmem:[#allocation10 + $0x64] sm:$0xf]
    %v1428 = vld [vmem:[#allocation10 + $0x68] sm:$0xf]
    %v1429 = vld [vmem:[#allocation10 + $0x6c] sm:$0xf]
    %v1430 = vld [vmem:[#allocation10 + $0x70] sm:$0xf]
    %v1431 = vld [vmem:[#allocation10 + $0x74] sm:$0xf]
    %v1432 = vld [vmem:[#allocation10 + $0x78] sm:$0xf]
    %v1433 = vld [vmem:[#allocation10 + $0x7c] sm:$0xf]
    %v1434 = vld [vmem:[#allocation14] sm:$0xff]
    %v1435 = vmul.f32 %v1434, 0.5
    %v1436 = vld [vmem:[%s6] sm:$0x1]
    %v1438 = vlaneseq
    %v1439 = vshrl.u32 %v1438, 7
    %v1440 = vsub.s32 0, %v1439
    %v1441 = vrot.slane %v1436, %v1440
    %v1475 = vunpack.c.l.b16 %v1402
    %v1476 = vunpack.c.l.b16 %v1403
    %v1477 = vunpack.c.l.b16 %v1404
    %v1478 = vunpack.c.l.b16 %v1405
    %v1479 = vunpack.c.l.b16 %v1406
    %v1480 = vunpack.c.l.b16 %v1407
    %v1481 = vunpack.c.l.b16 %v1408
    %v1482 = vunpack.c.l.b16 %v1409
    %v1483 = vunpack.c.l.b16 %v1410
    %v1484 = vunpack.c.l.b16 %v1411
    %v1485 = vunpack.c.l.b16 %v1412
    %v1486 = vunpack.c.l.b16 %v1413
    %v1487 = vunpack.c.l.b16 %v1414
    %v1488 = vunpack.c.l.b16 %v1415
    %v1489 = vunpack.c.l.b16 %v1416
    %v1490 = vunpack.c.l.b16 %v1417
    %v1491 = vunpack.c.l.b16 %v1418
    %v1492 = vunpack.c.l.b16 %v1419
    %v1493 = vunpack.c.l.b16 %v1420
    %v1494 = vunpack.c.l.b16 %v1421
    %v1495 = vunpack.c.l.b16 %v1422
    %v1496 = vunpack.c.l.b16 %v1423
    %v1497 = vunpack.c.l.b16 %v1424
    %v1498 = vunpack.c.l.b16 %v1425
    %v1499 = vunpack.c.l.b16 %v1426
    %v1500 = vunpack.c.l.b16 %v1427
    %v1501 = vunpack.c.l.b16 %v1428
    %v1502 = vunpack.c.l.b16 %v1429
    %v1503 = vunpack.c.l.b16 %v1430
    %v1504 = vunpack.c.l.b16 %v1431
    %v1505 = vunpack.c.l.b16 %v1432
    %v1506 = vunpack.c.l.b16 %v1433
    %v1507 = vpack.c.b16 %v1476, %v1475
    %v1508 = vpack.c.b16 %v1478, %v1477
    %v1509 = vpack.c.b16 %v1480, %v1479
    %v1510 = vpack.c.b16 %v1482, %v1481
    %v1511 = vpack.c.b16 %v1484, %v1483
    %v1512 = vpack.c.b16 %v1486, %v1485
    %v1513 = vpack.c.b16 %v1488, %v1487
    %v1514 = vpack.c.b16 %v1490, %v1489
    %v1515 = vpack.c.b16 %v1492, %v1491
    %v1516 = vpack.c.b16 %v1494, %v1493
    %v1517 = vpack.c.b16 %v1496, %v1495
    %v1518 = vpack.c.b16 %v1498, %v1497
    %v1519 = vpack.c.b16 %v1500, %v1499
    %v1520 = vpack.c.b16 %v1502, %v1501
    %v1521 = vpack.c.b16 %v1504, %v1503
    %v1522 = vpack.c.b16 %v1506, %v1505
    %1539 = vmatprep.subr.bf16.mxu0 0
    %1540 = vmatpush1.bf16.msra.mxu0 %v1507
    %1541 = vmatprep.subr.bf16.mxu0 0
    %1542 = vmatpush1.bf16.msra.mxu0 %v1508
    %1543 = vmatprep.subr.bf16.mxu0 0
    %1544 = vmatpush1.bf16.msra.mxu0 %v1509
    %1545 = vmatprep.subr.bf16.mxu0 0
    %1546 = vmatpush1.bf16.msra.mxu0 %v1510
    %1547 = vmatprep.subr.bf16.mxu0 0
    %1548 = vmatpush1.bf16.msra.mxu0 %v1511
    %1549 = vmatprep.subr.bf16.mxu0 0
    %1550 = vmatpush1.bf16.msra.mxu0 %v1512
    %1551 = vmatprep.subr.bf16.mxu0 0
    %1552 = vmatpush1.bf16.msra.mxu0 %v1513
    %1553 = vmatprep.subr.bf16.mxu0 0
    %1554 = vmatpush1.bf16.msra.mxu0 %v1514
    %1555 = vmatprep.subr.bf16.mxu0 0
    %1556 = vmatpush1.bf16.msra.mxu0 %v1515
    %1557 = vmatprep.subr.bf16.mxu0 0
    %1558 = vmatpush1.bf16.msra.mxu0 %v1516
    %1559 = vmatprep.subr.bf16.mxu0 0
    %1560 = vmatpush1.bf16.msra.mxu0 %v1517
    %1561 = vmatprep.subr.bf16.mxu0 0
    %1562 = vmatpush1.bf16.msra.mxu0 %v1518
    %1563 = vmatprep.subr.bf16.mxu0 0
    %1564 = vmatpush1.bf16.msra.mxu0 %v1519
    %1565 = vmatprep.subr.bf16.mxu0 0
    %1566 = vmatpush1.bf16.msra.mxu0 %v1520
    %1567 = vmatprep.subr.bf16.mxu0 0
    %1568 = vmatpush1.bf16.msra.mxu0 %v1521
    %1569 = vmatprep.subr.bf16.mxu0 0
    %1570 = vmatpush1.bf16.msra.mxu0 %v1522
    %1571 = vmatprep.mubr.bf16.mxu0 %v1401
    %1572 = vmatmul.mubr.bf16.gmra.mrb[0].mxu0 %v1400
    %v1573 = vpop.f32.mrb[0].mxu0
    %v1574 = vadd.f32 %v1441, %v1573
    %v1575 = vpop.f32.mrb[0].mxu0
    %v1576 = vpop.f32.mrb[0].mxu0
    %v1577 = vpop.f32.mrb[0].mxu0
    %1578 = vdwg.mxu0
    %v1579 = vmul.f32 %v1574, 0.5
    %v1580 = vadd.f32 %v1435, %v1579
    %1581 = vst [vmem:[#allocation14] sm:$0xff] %v1580
    %v1582 = vld [vmem:[#allocation14] sm:$0xff]
    %v1583 = vtanh.pop %v1582
    %1584 = vst [vmem:[#allocation2 + $0x8] sm:$0xff] %v1583
    %v1585 = vpack.c.bf16 %v1583, %v1583
    %v1586 = vld [vmem:[#allocation11] sm:$0xf]
    %v1587 = vld [vmem:[#allocation11 + $0x4] sm:$0xf]
    %v1588 = vld [vmem:[#allocation11 + $0x8] sm:$0xf]
    %v1589 = vld [vmem:[#allocation11 + $0xc] sm:$0xf]
    %v1590 = vld [vmem:[#allocation11 + $0x10] sm:$0xf]
    %v1591 = vld [vmem:[#allocation11 + $0x14] sm:$0xf]
    %v1592 = vld [vmem:[#allocation11 + $0x18] sm:$0xf]
    %v1593 = vld [vmem:[#allocation11 + $0x1c] sm:$0xf]
    %v1594 = vld [vmem:[#allocation11 + $0x20] sm:$0xf]
    %v1595 = vld [vmem:[#allocation11 + $0x24] sm:$0xf]
    %v1596 = vld [vmem:[#allocation11 + $0x28] sm:$0xf]
    %v1597 = vld [vmem:[#allocation11 + $0x2c] sm:$0xf]
    %v1598 = vld [vmem:[#allocation11 + $0x30] sm:$0xf]
    %v1599 = vld [vmem:[#allocation11 + $0x34] sm:$0xf]
    %v1600 = vld [vmem:[#allocation11 + $0x38] sm:$0xf]
    %v1601 = vld [vmem:[#allocation11 + $0x3c] sm:$0xf]
    %v1602 = vld [vmem:[%s8] sm:$0x1]
    %v1604 = vlaneseq
    %v1605 = vshrl.u32 %v1604, 7
    %v1606 = vsub.s32 0, %v1605
    %v1607 = vrot.slane %v1602, %v1606
    %v1625 = vunpack.c.l.b16 %v1586
    %v1626 = vunpack.c.l.b16 %v1587
    %v1627 = vunpack.c.l.b16 %v1588
    %v1628 = vunpack.c.l.b16 %v1589
    %v1629 = vunpack.c.l.b16 %v1590
    %v1630 = vunpack.c.l.b16 %v1591
    %v1631 = vunpack.c.l.b16 %v1592
    %v1632 = vunpack.c.l.b16 %v1593
    %v1633 = vunpack.c.l.b16 %v1594
    %v1634 = vunpack.c.l.b16 %v1595
    %v1635 = vunpack.c.l.b16 %v1596
    %v1636 = vunpack.c.l.b16 %v1597
    %v1637 = vunpack.c.l.b16 %v1598
    %v1638 = vunpack.c.l.b16 %v1599
    %v1639 = vunpack.c.l.b16 %v1600
    %v1640 = vunpack.c.l.b16 %v1601
    %v1641 = vpack.c.b16 %v1626, %v1625
    %v1642 = vpack.c.b16 %v1628, %v1627
    %v1643 = vpack.c.b16 %v1630, %v1629
    %v1644 = vpack.c.b16 %v1632, %v1631
    %v1645 = vpack.c.b16 %v1634, %v1633
    %v1646 = vpack.c.b16 %v1636, %v1635
    %v1647 = vpack.c.b16 %v1638, %v1637
    %v1648 = vpack.c.b16 %v1640, %v1639
    %1657 = vmatprep.subr.bf16.mxu0 0
    %1658 = vmatpush1.bf16.msra.mxu0 %v1641
    %1659 = vmatprep.subr.bf16.mxu0 0
    %1660 = vmatpush1.bf16.msra.mxu0 %v1642
    %1661 = vmatprep.subr.bf16.mxu0 0
    %1662 = vmatpush1.bf16.msra.mxu0 %v1643
    %1663 = vmatprep.subr.bf16.mxu0 0
    %1664 = vmatpush1.bf16.msra.mxu0 %v1644
    %1665 = vmatprep.subr.bf16.mxu0 0
    %1666 = vmatpush1.bf16.msra.mxu0 %v1645
    %1667 = vmatprep.subr.bf16.mxu0 0
    %1668 = vmatpush1.bf16.msra.mxu0 %v1646
    %1669 = vmatprep.subr.bf16.mxu0 0
    %1670 = vmatpush1.bf16.msra.mxu0 %v1647
    %1671 = vmatprep.subr.bf16.mxu0 0
    %1672 = vmatpush1.bf16.msra.mxu0 %v1648
    %1673 = vmatprep.subr.bf16.mxu0 0
    %1674 = vmatpush1.bf16.msra.mxu0 0
    %1675 = vmatprep.subr.bf16.mxu0 0
    %1676 = vmatpush1.bf16.msra.mxu0 0
    %1677 = vmatprep.subr.bf16.mxu0 0
    %1678 = vmatpush1.bf16.msra.mxu0 0
    %1679 = vmatprep.subr.bf16.mxu0 0
    %1680 = vmatpush1.bf16.msra.mxu0 0
    %1681 = vmatprep.subr.bf16.mxu0 0
    %1682 = vmatpush1.bf16.msra.mxu0 0
    %1683 = vmatprep.subr.bf16.mxu0 0
    %1684 = vmatpush1.bf16.msra.mxu0 0
    %1685 = vmatprep.subr.bf16.mxu0 0
    %1686 = vmatpush1.bf16.msra.mxu0 0
    %1687 = vmatprep.subr.bf16.mxu0 0
    %1688 = vmatpush1.bf16.msra.mxu0 0
    %1689 = vmatprep.mubr.bf16.mxu0 0
    %1690 = vmatmul.mubr.bf16.gmra.mrb[0].mxu0 %v1585
    %v1691 = vpop.f32.mrb[0].mxu0
    %v1692 = vadd.f32 %v1607, %v1691
    %v1693 = vpop.f32.mrb[0].mxu0
    %v1694 = vpop.f32.mrb[0].mxu0
    %v1695 = vpop.f32.mrb[0].mxu0
    %1696 = vdwg.mxu0
    %v1697 = vtanh.pop %v1692
    %s1698 = scalar_lea.vmem [#allocation13], 32
    %1699 = vst [vmem:[%s1698] sm:$0xff] %v1697
    %s1700 = scalar_lea.vmem [#allocation8], 32
    %v1701 = vld [vmem:[%s1700] sm:$0xff]
    %v1702 = vsub.f32 %v1697, %v1701
    %v1703 = vmul.f32 %v1702, %v1702
    %1704 = vadd.xlane.f32.xlu0 %v1703
    %v1705 = vpop.xlane.xlu0 %1704
    %vm1706 = vcmask 39968
    %1707 = vst.msk [vmem:[#allocation16] sm:$0xff] %vm1706, %v1705
    // Predicated region
    $region70: #{ctrnn_sequence.1} parent=1 // pred_check
      _
    $region71: #{ctrnn_sequence.1} parent=1 // pred_check_branch
      %1709 = sbr.rel (0) target = $region73
    $region72: #{ctrnn_sequence.1} parent=1 // pred_region
      %s1711 = ssub.s32 640, 640
      %1712 = vsyncadd [#allocation7], %s1711
      %s1713 = sshll.u32 [#allocation13], 4
      %s1714 = int_to_ptr.vmem [resolvable:$true] %s1713
      %1719 = dma.vmem_to_hbm [thread:$0]  %s1714, 640, %s9, [#allocation7], 128, 128, 8
    $region73: #{ctrnn_sequence.1} parent=1 // pred_fallthru
      _
    // Predicated region
    $region74: #{ctrnn_sequence.1} parent=1 // pred_check
      _
    $region75: #{ctrnn_sequence.1} parent=1 // pred_check_branch
      %1721 = sbr.rel (0) target = $region77
    $region76: #{ctrnn_sequence.1} parent=1 // pred_region
      %s1723 = ssub.s32 128, 128
      %1724 = vsyncadd [#allocation15], %s1723
      %s1726 = sshll.u32 [#allocation14], 4
      %s1727 = int_to_ptr.vmem [resolvable:$true] %s1726
      %1729 = dma.vmem_to_hbm [thread:$0]  %s1727, 128, %s10, [#allocation15]
    $region77: #{ctrnn_sequence.1} parent=1 // pred_fallthru
      _
    // Predicated region
    $region78: #{ctrnn_sequence.1} parent=1 // pred_check
      _
    $region79: #{ctrnn_sequence.1} parent=1 // pred_check_branch
      %1731 = sbr.rel (0) target = $region81
    $region80: #{ctrnn_sequence.1} parent=1 // pred_region
      %s1733 = ssub.s32 128, 128
      %1734 = vsyncadd [#allocation15], %s1733
      %s1736 = sshll.u32 [#allocation16], 4
      %s1737 = int_to_ptr.vmem [resolvable:$true] %s1736
      %1739 = dma.vmem_to_hbm [thread:$0]  %s1737, 128, %s11, [#allocation15]
    $region81: #{ctrnn_sequence.1} parent=1 // pred_fallthru
      _
    // Predicated region
    $region82: #{ctrnn_sequence.1} parent=1 // pred_check
      _
    $region83: #{ctrnn_sequence.1} parent=1 // pred_check_branch
      %1741 = sbr.rel (0) target = $region85
    $region84: #{ctrnn_sequence.1} parent=1 // pred_region
      %1742 = dma.done [#allocation7], 640
    $region85: #{ctrnn_sequence.1} parent=1 // pred_fallthru
      _
    // Predicated region
    $region86: #{ctrnn_sequence.1} parent=1 // pred_check
      _
    $region87: #{ctrnn_sequence.1} parent=1 // pred_check_branch
      %1744 = sbr.rel (0) target = $region89
    $region88: #{ctrnn_sequence.1} parent=1 // pred_region
      %1745 = dma.done [#allocation15], 128
    $region89: #{ctrnn_sequence.1} parent=1 // pred_fallthru
      _
    // Predicated region
    $region90: #{ctrnn_sequence.1} parent=1 // pred_check
      _
    $region91: #{ctrnn_sequence.1} parent=1 // pred_check_branch
      %1747 = sbr.rel (0) target = $region93
    $region92: #{ctrnn_sequence.1} parent=1 // pred_region
      %1748 = dma.done [#allocation15], 128
    $region93: #{ctrnn_sequence.1} parent=1 // pred_fallthru
      _
    %1749 = vsyncpa [#allocation6], 1
    %1750 = vsyncpa [#allocation9], 1
    %1751 = vsyncpa [#allocation12], 1
    %1752 = vsyncpa [#allocation7], 1
    %1753 = vsyncpa [#allocation15], 1

</llo_original>
